<compile_context>
chip_gen: v5e
topology: v5e:2x2
jax: 0.10.0
libtpu: 0.0.40
codegen_flags: <defaults>
</compile_context>

<pallas_src>
import functools

import jax
import jax.numpy as jnp
from jax.experimental import pallas as pl
from jax.experimental.pallas import tpu as pltpu

EPS = 1e-5
K = 3            # ConvNormRelu defaults (no downsample): kernel_size=3, stride=1, padding=1
LANE = 128
SUBLANE = 8


def _round_up(n, m):
    return (n + m - 1) // m * m


def _vmem_limit_bytes():
    """~75% of physical VMEM, capped at 96 MiB (safe on v5e/v6e 128 MiB and v7x 64 MiB)."""
    cap = 64 * 1024 * 1024
    try:
        cap = int(pltpu.get_tpu_info().vmem_capacity_bytes)
    except Exception:
        pass
    return int(min(96 * 1024 * 1024, (cap * 3) // 4))


_VMEM_LIMIT = _vmem_limit_bytes()


# ----------------------------------------------------------------------------- pass 1
def _conv_stats_kernel(x_ref, w_ref, yr_ref, ps_ref, *, k_taps, t_real):
    """Fused (main || residual) conv + BN partial sums for one (batch, T-tile).

    x_ref : (1, 1, Tt + halo, C)   bf16  per-tile input window (halo=2 tap path, 0 packed)
    w_ref : (k_taps, C, 2*Cout_p)  bf16  weights  [ main | residual ], no biases
    yr_ref: (1, Tt, 2*Cout_p)      bf16  conv outputs [ y | r ]
    ps_ref: (1, 1, 2, Cout_p)      f32   per-tile [ sum(y), centered sum-of-squares(y) ]
    """
    tt = yr_ref.shape[1]
    cout_p = ps_ref.shape[3]

    # Conv = one MXU matmul per tap, accumulated in f32 (no im2col materialisation).
    yr = jnp.dot(x_ref[0, 0, pl.ds(0, tt), :], w_ref[0],
                 preferred_element_type=jnp.float32)
    for k in range(1, k_taps):
        yr = yr + jnp.dot(x_ref[0, 0, pl.ds(k, tt), :], w_ref[k],
                          preferred_element_type=jnp.float32)

    # bf16 intermediate: halves the pass-1 writeback and the pass-2 read HBM traffic.
    yr_ref[0] = yr.astype(yr_ref.dtype)

    # BN partial statistics from the f32 accumulator.  Per-tile mean-centered sums of
    # squares -> no E[y^2]-E[y]^2 cancellation after the hierarchical combine in glue.
    y = yr[:, :cout_p]

    def emit_stats(n_valid, valid=None):
        ym = y if valid is None else y * valid
        s = jnp.sum(ym, axis=0, keepdims=True)                      # (1, Cout_p)
        yc = y - s * jnp.float32(1.0 / n_valid)                     # tile-mean centered
        if valid is not None:
            yc = yc * valid
        q = jnp.sum(yc * yc, axis=0, keepdims=True)                 # (1, Cout_p)
        ps_ref[0, 0] = jnp.concatenate([s, q], axis=0)              # (2, Cout_p)

    n_full = t_real // tt            # tiles 0..n_full-1 are fully valid (static)
    rem = t_real - n_full * tt       # valid rows of the single partial tile (if any)
    if rem == 0:
        emit_stats(tt)               # no masking work at all when T divides the tile
    else:
        @pl.when(pl.program_id(1) < n_full)
        def _():
            emit_stats(tt)

        @pl.when(pl.program_id(1) >= n_full)
        def _():
            row = jax.lax.broadcasted_iota(jnp.int32, (tt, 1), 0)
            emit_stats(rem, (row < rem).astype(jnp.float32))


# ----------------------------------------------------------------------------- pass 2
def _norm_relu_kernel(yr_ref, scale_ref, shift_ref, out_ref):
    """out[c, t] = relu(y*scale + shift + r); stored transposed -> NCT layout directly."""
    cout_p = scale_ref.shape[1]
    yr = yr_ref[0]                                                  # (Tt2, 2*Cout_p) bf16
    y = yr[:, :cout_p].astype(jnp.float32)
    r = yr[:, cout_p:].astype(jnp.float32)
    res = jnp.maximum(y * scale_ref[...] + shift_ref[...] + r, 0.0)
    # XLU transpose is effectively free in this mem-bound epilogue; saves the extra
    # XLA transpose (a full HBM read+write of the output) in the wrapper.
    out_ref[0] = jnp.transpose(res, (1, 0))                         # (Cout_p, Tt2)


def _pick_pass2_rows(nt, t_tile, cout_p):
    """Largest pass-2 T block (a multiple of the pass-1 tile that divides t_pad) fitting
    comfortably in VMEM: pass 2 is pure mem-bound, so bigger blocks = fewer grid steps
    and long unmasked lane-dense store streams."""
    bytes_per_row = 2 * cout_p * 2 + cout_p * 4        # yr (bf16) + out (f32)
    cap_rows = min(2048, max(t_tile, _VMEM_LIMIT // (4 * bytes_per_row)))
    best = 1
    for m in range(1, nt + 1):
        if nt % m == 0 and m * t_tile <= cap_rows:
            best = m
    return best * t_tile


# ----------------------------------------------------------------------------- wrapper
@functools.partial(jax.jit, static_argnames=("tt",))
def conv_norm_relu_1d(x, w, b, wr, br, gamma, beta, *, tt=512):
    """ConvNormRelu('1d', residual=True with C_in != C_out, norm='bn', training-mode
    batch statistics, dropout p=0).

    x : (B, C_in, T) f32 (PyTorch NCT);  w, wr : (C_out, C_in, K);  b, br, gamma, beta : (C_out,)
    returns (B, C_out, T) f32

    The main-conv bias `b` shifts only the batch mean and cancels exactly in
    training-mode BN, so it is dropped from the fused matmul (NOT valid for eval-mode
    running statistics).  `tt` is the T tile size (rounded to a multiple of 128); on
    VMEM-tight configs (v5e) it can be lowered toward 128 without hurting the MXU.
    """
    del b
    B, C_in, T = x.shape
    C_out = w.shape[0]
    cout_p = _round_up(C_out, LANE)
    cin_p = _round_up(C_in, LANE)
    kc_p = _round_up(K * C_in, LANE)

    # T tiling: multiples of 128 keep every store lane-dense (incl. the transposed NCT
    # output of pass 2) and keep the matmul M dimension MXU-friendly.
    t_tile = _round_up(min(tt, T), LANE)
    t_pad = _round_up(T, t_tile)
    nt = t_pad // t_tile

    # Glue: channel-last view of x (a channel-last caller could skip this transpose).
    x_tc = jnp.transpose(x, (0, 2, 1))                                    # (B, T, C_in)

    # Pack the K taps into the lane axis when that does not widen the x stream
    # (K*C_in <= round_up(C_in,128)); otherwise keep lane-dense C_in and accumulate taps.
    use_packed = kc_p <= cin_p

    if use_packed:
        # Glue im2col: contraction is round_up(K*C_in,128) instead of K*round_up(C_in,128)
        # (3x fewer MXU pushes and no zero-inflated x DMA for small C_in).
        x_halo = jnp.pad(x_tc, ((0, 0), (1, 1 + t_pad - T), (0, 0)))      # (B, t_pad+2, C_in)
        xcol = jnp.concatenate([x_halo[:, k:k + t_pad, :] for k in range(K)], axis=-1)
        xcol = jnp.pad(xcol, ((0, 0), (0, 0), (0, kc_p - K * C_in)))
        x_win = xcol.astype(jnp.bfloat16).reshape(B, nt, t_tile, kc_p)
        k_taps, halo, c_eff = 1, 0, kc_p

        def prep(wm):                                                     # (kc_p, cout_p)
            wk = jnp.transpose(wm, (2, 1, 0)).reshape(K * C_in, C_out)    # row = k*C_in + c
            return jnp.pad(wk, ((0, kc_p - K * C_in), (0, cout_p - C_out)))

        w_cat = jnp.concatenate([prep(w), prep(wr)], axis=-1)
        w_cat = w_cat.reshape(1, kc_p, 2 * cout_p).astype(jnp.bfloat16)
    else:
        # Tap path: per-tile windows with a 2-row halo so resident VMEM is O(t_tile*C_in),
        # independent of T (v7x 64 MiB budget); kernel accumulates K matmuls.
        x_halo = jnp.pad(
            x_tc, ((0, 0), (1, 1 + t_pad - T), (0, cin_p - C_in))
        ).astype(jnp.bfloat16)                                            # (B, t_pad+2, cin_p)
        x_win = jnp.stack(
            [x_halo[:, i * t_tile:i * t_tile + t_tile + 2, :] for i in range(nt)], axis=1)
        k_taps, halo, c_eff = K, 2, cin_p

        def prep(wm):                                                     # (K, cin_p, cout_p)
            wk = jnp.transpose(wm, (2, 1, 0))                             # wk[k,c,o]=w[o,c,k]
            return jnp.pad(wk, ((0, 0), (0, cin_p - C_in), (0, cout_p - C_out)))

        w_cat = jnp.concatenate([prep(w), prep(wr)], axis=-1).astype(jnp.bfloat16)

    # ---- pass 1: fused dual conv (bf16 MXU, f32 acc) + BN partial sums ------------------
    yr, psum = pl.pallas_call(
        functools.partial(_conv_stats_kernel, k_taps=k_taps, t_real=T),
        grid=(B, nt),
        in_specs=[
            pl.BlockSpec((1, 1, t_tile + halo, c_eff), lambda bi, ti: (bi, ti, 0, 0)),
            # TODO(synk): single-buffer this constant-index operand with
            # pipeline_mode=pl.Buffered(1) once confirmed supported by pallas_call.
            pl.BlockSpec((k_taps, c_eff, 2 * cout_p), lambda bi, ti: (0, 0, 0)),
        ],
        out_specs=(
            pl.BlockSpec((1, t_tile, 2 * cout_p), lambda bi, ti: (bi, ti, 0)),
            pl.BlockSpec((1, 1, 2, cout_p), lambda bi, ti: (bi, ti, 0, 0)),
        ),
        out_shape=(
            jax.ShapeDtypeStruct((B, t_pad, 2 * cout_p), jnp.bfloat16),   # bf16 intermediate
            jax.ShapeDtypeStruct((B, nt, 2, cout_p), jnp.float32),
        ),
        compiler_params=pltpu.CompilerParams(
            # Per-tile x windows => no shared block is re-read along either axis, so both
            # axes can be split across v7x's two TensorCores without duplicated DMA.
            dimension_semantics=("parallel", "parallel"),
            vmem_limit_bytes=_VMEM_LIMIT,
        ),
    )(x_win, w_cat)

    # ---- glue: hierarchical (per-tile -> global) BN statistics, O(C_out) math -----------
    count = jnp.float32(B * T)
    rem = T - (nt - 1) * t_tile                           # valid rows in the last tile
    n_i = jnp.full((nt,), float(t_tile), jnp.float32).at[-1].set(float(rem))
    s_i = psum[:, :, 0, :]                                # (B, nt, Cout_p) per-tile sums
    q_i = psum[:, :, 1, :]                                # per-tile centered SS
    mean = jnp.sum(s_i, axis=(0, 1)) / count
    m_i = s_i / n_i[None, :, None]
    ss = jnp.sum(q_i, axis=(0, 1)) + jnp.sum(
        n_i[None, :, None] * (m_i - mean) ** 2, axis=(0, 1))
    var = ss / count                                      # biased variance (training fwd)
    inv = jax.lax.rsqrt(var + EPS)
    g = jnp.pad(gamma, (0, cout_p - C_out)).astype(jnp.float32)
    bt = jnp.pad(beta, (0, cout_p - C_out)).astype(jnp.float32)
    brp = jnp.pad(br, (0, cout_p - C_out)).astype(jnp.float32)
    scale = (g * inv).reshape(1, cout_p)
    shift = (bt - g * mean * inv + brp).reshape(1, cout_p)  # residual bias folded into shift

    # ---- pass 2: normalize + residual + ReLU; big T blocks; direct NCT output -----------
    t_tile2 = _pick_pass2_rows(nt, t_tile, cout_p)
    nt2 = t_pad // t_tile2
    out_pad = pl.pallas_call(
        _norm_relu_kernel,
        grid=(B, nt2),
        in_specs=[
            pl.BlockSpec((1, t_tile2, 2 * cout_p), lambda bi, ti: (bi, ti, 0)),
            pl.BlockSpec((1, cout_p), lambda bi, ti: (0, 0)),
            pl.BlockSpec((1, cout_p), lambda bi, ti: (0, 0)),
        ],
        out_specs=pl.BlockSpec((1, cout_p, t_tile2), lambda bi, ti: (bi, 0, ti)),
        out_shape=jax.ShapeDtypeStruct((B, cout_p, t_pad), jnp.float32),
        compiler_params=pltpu.CompilerParams(
            dimension_semantics=("parallel", "parallel"),
            vmem_limit_bytes=_VMEM_LIMIT,
        ),
    )(yr, scale, shift)

    return out_pad[:, :C_out, :T]                          # already (B, C_out, T)


# ----------------------------------------------------------------------------- reference
def reference(x, w, b, wr, br, gamma, beta, cast=None):
    """Pure-JAX mirror of the PyTorch forward (training-mode BN, dropout p=0).
    `cast=jnp.bfloat16` rounds the conv inputs the same way the kernel's MXU path does."""
    if cast is not None:
        x = x.astype(cast).astype(jnp.float32)
        w = w.astype(cast).astype(jnp.float32)
        wr = wr.astype(cast).astype(jnp.float32)

    def conv1d(x, w, b):
        y = jax.lax.conv_general_dilated(
            x, w, window_strides=(1,), padding=((1, 1),),
            dimension_numbers=('NCH', 'OIH', 'NCH'))
        return y + b[None, :, None]

    y = conv1d(x, w, b)                                                   # (B, C_out, T)
    mean = jnp.mean(y, axis=(0, 2), keepdims=True)
    var = jnp.mean((y - mean) ** 2, axis=(0, 2), keepdims=True)           # biased (fwd)
    y_hat = (y - mean) / jnp.sqrt(var + EPS)
    out = gamma[None, :, None] * y_hat + beta[None, :, None]
    out = out + conv1d(x, wr, br)                                         # residual conv
    return jnp.maximum(out, 0.0)


if __name__ == "__main__":
    def run_case(name, B, C_in, C_out, T, key):
        kx, kw, kb, kwr, kbr, kg, kbt = jax.random.split(key, 7)
        x = jax.random.normal(kx, (B, C_in, T), jnp.float32)
        fan_in = C_in * K
        w = jax.random.normal(kw, (C_out, C_in, K), jnp.float32) / jnp.sqrt(fan_in)
        b = jax.random.normal(kb, (C_out,), jnp.float32) * 0.1
        wr = jax.random.normal(kwr, (C_out, C_in, K), jnp.float32) / jnp.sqrt(fan_in)
        br = jax.random.normal(kbr, (C_out,), jnp.float32) * 0.1
        gamma = 1.0 + 0.1 * jax.random.normal(kg, (C_out,), jnp.float32)
        beta = 0.1 * jax.random.normal(kbt, (C_out,), jnp.float32)

        out = jax.block_until_ready(conv_norm_relu_1d(x, w, b, wr, br, gamma, beta))
        assert out.shape == (B, C_out, T), (name, out.shape)

        # Conv runs in bf16 on the MXU and the y/r intermediate is stored in bf16:
        # compare tightly against a bf16-rounded-input reference, loosely against f32.
        ref_bf16 = reference(x, w, b, wr, br, gamma, beta, cast=jnp.bfloat16)
        ref_f32 = reference(x, w, b, wr, br, gamma, beta)
        assert jnp.allclose(out, ref_bf16, atol=3e-2, rtol=5e-2), f"{name}: mismatch vs bf16 ref"
        assert jnp.allclose(out, ref_f32, atol=1e-1, rtol=1e-1), f"{name}: mismatch vs f32 ref"

    key = jax.random.PRNGKey(0)
    k1, k2 = jax.random.split(key)
    run_case("packed-path", B=2, C_in=4, C_out=8, T=16, key=k1)    # C_in << 128 -> glue im2col
    run_case("tap-path", B=2, C_in=128, C_out=16, T=40, key=k2)    # lane-dense C_in -> 3 taps
    print("KERNEL_OK")
</pallas_src>

<mosaic_0001>
module attributes {stable_mosaic.version = 11 : i64} {
  func.func @_conv_stats_kernel(%arg0: i32, %arg1: i32, %arg2: memref<1x1x128x128xbf16, #tpu.memory_space<vmem>>, %arg3: memref<1x128x256xbf16, #tpu.memory_space<vmem>>, %arg4: memref<1x128x256xbf16, #tpu.memory_space<vmem>>, %arg5: memref<1x1x2x128xf32, #tpu.memory_space<vmem>>) attributes {dimension_semantics = [#tpu.dimension_semantics<parallel>, #tpu.dimension_semantics<parallel>], iteration_bounds = array<i64: 2, 1>, scalar_prefetch = 0 : i64, scratch_operands = 0 : i64, tpu.core_type = #tpu.core_type<tc>, window_params = [{transform_indices = @transform_0, window_bounds = array<i64: 1, 1, 128, 128>}, {pipeline_mode = #tpu.pipeline_mode<synchronous>, transform_indices = @transform_1, window_bounds = array<i64: 1, 128, 256>}, {transform_indices = @transform_2, window_bounds = array<i64: 1, 128, 256>}, {transform_indices = @transform_3, window_bounds = array<i64: 1, 1, 2, 128>}]} {
    %c0 = arith.constant 0 : index
    %c0_0 = arith.constant 0 : index
    %c0_1 = arith.constant 0 : index
    %c0_2 = arith.constant 0 : index
    %0 = vector.load %arg2[%c0, %c0_0, %c0_1, %c0_2] : memref<1x1x128x128xbf16, #tpu.memory_space<vmem>>, vector<1x1x128x128xbf16>
    %1 = vector.shape_cast %0 : vector<1x1x128x128xbf16> to vector<128x128xbf16>
    %c0_3 = arith.constant 0 : index
    %c0_4 = arith.constant 0 : index
    %c0_5 = arith.constant 0 : index
    %2 = vector.load %arg3[%c0_3, %c0_4, %c0_5] : memref<1x128x256xbf16, #tpu.memory_space<vmem>>, vector<1x128x256xbf16>
    %3 = vector.shape_cast %2 : vector<1x128x256xbf16> to vector<128x256xbf16>
    %cst = arith.constant dense<0.000000e+00> : vector<128x256xf32>
    %4 = tpu.matmul %1, %3, %cst {dimension_numbers = #tpu.dot_dimension_numbers<[1], [0], [0], [1], [0, 0, 1, 1], [], []>} : vector<128x128xbf16>, vector<128x256xbf16>, vector<128x256xf32> -> vector<128x256xf32>
    %5 = arith.truncf %4 : vector<128x256xf32> to vector<128x256xbf16>
    %c0_6 = arith.constant 0 : index
    %c0_7 = arith.constant 0 : index
    %c0_8 = arith.constant 0 : index
    %6 = vector.load %arg4[%c0_6, %c0_7, %c0_8] : memref<1x128x256xbf16, #tpu.memory_space<vmem>>, vector<1x128x256xbf16>
    %7 = vector.shape_cast %6 : vector<1x128x256xbf16> to vector<128x256xbf16>
    %8 = vector.shape_cast %5 : vector<128x256xbf16> to vector<1x128x256xbf16>
    tpu.vector_store %arg4[%c0_6, %c0_7, %c0_8], %8 {strides = array<i32>} : memref<1x128x256xbf16, #tpu.memory_space<vmem>>, vector<1x128x256xbf16>,
    %9 = vector.extract_strided_slice %4 {offsets = [0, 0], sizes = [128, 128], strides = [1, 1]} : vector<128x256xf32> to vector<128x128xf32>
    %c0_i32 = arith.constant 0 : i32
    %10 = arith.cmpi slt, %arg1, %c0_i32 : i32
    %11 = arith.extui %10 : i1 to i32
    %c0_i32_9 = arith.constant 0 : i32
    %12 = arith.cmpi ne, %11, %c0_i32_9 : i32
    scf.if %12 {
      %cst_12 = arith.constant dense<0.000000e+00> : vector<128xf32>
      %16 = vector.multi_reduction <add>, %9, %cst_12 [0] : vector<128x128xf32> to vector<128xf32>
      %17 = vector.shape_cast %16 : vector<128xf32> to vector<1x128xf32>
      %cst_13 = arith.constant 7.812500e-03 : f32
      %18 = vector.broadcast %cst_13 : f32 to vector<1x128xf32>
      %19 = arith.mulf %17, %18 : vector<1x128xf32>
      %20 = vector.broadcast %19 : vector<1x128xf32> to vector<128x128xf32>
      %21 = arith.subf %9, %20 : vector<128x128xf32>
      %22 = arith.mulf %21, %21 : vector<128x128xf32>
      %cst_14 = arith.constant dense<0.000000e+00> : vector<128xf32>
      %23 = vector.multi_reduction <add>, %22, %cst_14 [0] : vector<128x128xf32> to vector<128xf32>
      %24 = vector.shape_cast %23 : vector<128xf32> to vector<1x128xf32>
      %25 = tpu.concatenate %17, %24 in 0 : vector<1x128xf32>, vector<1x128xf32> -> vector<2x128xf32>
      %c0_15 = arith.constant 0 : index
      %c0_16 = arith.constant 0 : index
      %c0_17 = arith.constant 0 : index
      %c0_18 = arith.constant 0 : index
      %26 = vector.load %arg5[%c0_15, %c0_16, %c0_17, %c0_18] : memref<1x1x2x128xf32, #tpu.memory_space<vmem>>, vector<1x1x2x128xf32>
      %27 = vector.shape_cast %26 : vector<1x1x2x128xf32> to vector<2x128xf32>
      %28 = vector.shape_cast %25 : vector<2x128xf32> to vector<1x1x2x128xf32>
      tpu.vector_store %arg5[%c0_15, %c0_16, %c0_17, %c0_18], %28 {strides = array<i32>} : memref<1x1x2x128xf32, #tpu.memory_space<vmem>>, vector<1x1x2x128xf32>,
    } else {
    }
    %c0_i32_10 = arith.constant 0 : i32
    %13 = arith.cmpi sge, %arg1, %c0_i32_10 : i32
    %14 = arith.extui %13 : i1 to i32
    %c0_i32_11 = arith.constant 0 : i32
    %15 = arith.cmpi ne, %14, %c0_i32_11 : i32
    scf.if %15 {
      %16 = tpu.iota {dimensions = array<i32: 0>} : vector<128x1xi32>
      %c16_i32 = arith.constant 16 : i32
      %17 = vector.broadcast %c16_i32 : i32 to vector<128x1xi32>
      %18 = arith.cmpi slt, %16, %17 : vector<128x1xi32>
      %19 = arith.extui %18 : vector<128x1xi1> to vector<128x1xi32>
      %20 = arith.sitofp %19 : vector<128x1xi32> to vector<128x1xf32>
      %21 = vector.broadcast %20 : vector<128x1xf32> to vector<128x128xf32>
      %22 = arith.mulf %9, %21 : vector<128x128xf32>
      %cst_12 = arith.constant dense<0.000000e+00> : vector<128xf32>
      %23 = vector.multi_reduction <add>, %22, %cst_12 [0] : vector<128x128xf32> to vector<128xf32>
      %24 = vector.shape_cast %23 : vector<128xf32> to vector<1x128xf32>
      %cst_13 = arith.constant 6.250000e-02 : f32
      %25 = vector.broadcast %cst_13 : f32 to vector<1x128xf32>
      %26 = arith.mulf %24, %25 : vector<1x128xf32>
      %27 = vector.broadcast %26 : vector<1x128xf32> to vector<128x128xf32>
      %28 = arith.subf %9, %27 : vector<128x128xf32>
      %29 = vector.broadcast %20 : vector<128x1xf32> to vector<128x128xf32>
      %30 = arith.mulf %28, %29 : vector<128x128xf32>
      %31 = arith.mulf %30, %30 : vector<128x128xf32>
      %cst_14 = arith.constant dense<0.000000e+00> : vector<128xf32>
      %32 = vector.multi_reduction <add>, %31, %cst_14 [0] : vector<128x128xf32> to vector<128xf32>
      %33 = vector.shape_cast %32 : vector<128xf32> to vector<1x128xf32>
      %34 = tpu.concatenate %24, %33 in 0 : vector<1x128xf32>, vector<1x128xf32> -> vector<2x128xf32>
      %c0_15 = arith.constant 0 : index
      %c0_16 = arith.constant 0 : index
      %c0_17 = arith.constant 0 : index
      %c0_18 = arith.constant 0 : index
      %35 = vector.load %arg5[%c0_15, %c0_16, %c0_17, %c0_18] : memref<1x1x2x128xf32, #tpu.memory_space<vmem>>, vector<1x1x2x128xf32>
      %36 = vector.shape_cast %35 : vector<1x1x2x128xf32> to vector<2x128xf32>
      %37 = vector.shape_cast %34 : vector<2x128xf32> to vector<1x1x2x128xf32>
      tpu.vector_store %arg5[%c0_15, %c0_16, %c0_17, %c0_18], %37 {strides = array<i32>} : memref<1x1x2x128xf32, #tpu.memory_space<vmem>>, vector<1x1x2x128xf32>,
    } else {
    }
    return
  }
  func.func @transform_0(%arg0: i32, %arg1: i32) -> (i32, i32, i32, i32) {
    %c0_i32 = arith.constant 0 : i32
    %c0_i32_0 = arith.constant 0 : i32
    %c0_i32_1 = arith.constant 0 : i32
    return %arg0, %arg1, %c0_i32, %c0_i32_0 : i32, i32, i32, i32
  }
  func.func @transform_1(%arg0: i32, %arg1: i32) -> (i32, i32, i32) {
    %c0_i32 = arith.constant 0 : i32
    %c0_i32_0 = arith.constant 0 : i32
    %c0_i32_1 = arith.constant 0 : i32
    %c0_i32_2 = arith.constant 0 : i32
    return %c0_i32, %c0_i32_0, %c0_i32_1 : i32, i32, i32
  }
  func.func @transform_2(%arg0: i32, %arg1: i32) -> (i32, i32, i32) {
    %c0_i32 = arith.constant 0 : i32
    %c0_i32_0 = arith.constant 0 : i32
    return %arg0, %arg1, %c0_i32 : i32, i32, i32
  }
  func.func @transform_3(%arg0: i32, %arg1: i32) -> (i32, i32, i32, i32) {
    %c0_i32 = arith.constant 0 : i32
    %c0_i32_0 = arith.constant 0 : i32
    %c0_i32_1 = arith.constant 0 : i32
    return %arg0, %arg1, %c0_i32, %c0_i32_0 : i32, i32, i32, i32
  }
}

module attributes {stable_mosaic.version = 11 : i64} {
  func.func @_norm_relu_kernel(%arg0: i32, %arg1: i32, %arg2: memref<1x128x256xbf16, #tpu.memory_space<vmem>>, %arg3: memref<1x128xf32, #tpu.memory_space<vmem>>, %arg4: memref<1x128xf32, #tpu.memory_space<vmem>>, %arg5: memref<1x128x128xf32, #tpu.memory_space<vmem>>) attributes {dimension_semantics = [#tpu.dimension_semantics<parallel>, #tpu.dimension_semantics<parallel>], iteration_bounds = array<i64: 2, 1>, scalar_prefetch = 0 : i64, scratch_operands = 0 : i64, tpu.core_type = #tpu.core_type<tc>, window_params = [{transform_indices = @transform_0, window_bounds = array<i64: 1, 128, 256>}, {pipeline_mode = #tpu.pipeline_mode<synchronous>, transform_indices = @transform_1, window_bounds = array<i64: 1, 128>}, {pipeline_mode = #tpu.pipeline_mode<synchronous>, transform_indices = @transform_2, window_bounds = array<i64: 1, 128>}, {transform_indices = @transform_3, window_bounds = array<i64: 1, 128, 128>}]} {
    %c0 = arith.constant 0 : index
    %c0_0 = arith.constant 0 : index
    %c0_1 = arith.constant 0 : index
    %0 = vector.load %arg2[%c0, %c0_0, %c0_1] : memref<1x128x256xbf16, #tpu.memory_space<vmem>>, vector<1x128x256xbf16>
    %1 = vector.shape_cast %0 : vector<1x128x256xbf16> to vector<128x256xbf16>
    %2 = vector.extract_strided_slice %1 {offsets = [0, 0], sizes = [128, 128], strides = [1, 1]} : vector<128x256xbf16> to vector<128x128xbf16>
    %3 = arith.extf %2 : vector<128x128xbf16> to vector<128x128xf32>
    %4 = vector.extract_strided_slice %1 {offsets = [0, 128], sizes = [128, 128], strides = [1, 1]} : vector<128x256xbf16> to vector<128x128xbf16>
    %5 = arith.extf %4 : vector<128x128xbf16> to vector<128x128xf32>
    %c0_2 = arith.constant 0 : index
    %c0_3 = arith.constant 0 : index
    %6 = vector.load %arg3[%c0_2, %c0_3] : memref<1x128xf32, #tpu.memory_space<vmem>>, vector<1x128xf32>
    %7 = vector.broadcast %6 : vector<1x128xf32> to vector<128x128xf32>
    %8 = arith.mulf %3, %7 : vector<128x128xf32>
    %c0_4 = arith.constant 0 : index
    %c0_5 = arith.constant 0 : index
    %9 = vector.load %arg4[%c0_4, %c0_5] : memref<1x128xf32, #tpu.memory_space<vmem>>, vector<1x128xf32>
    %10 = vector.broadcast %9 : vector<1x128xf32> to vector<128x128xf32>
    %11 = arith.addf %8, %10 : vector<128x128xf32>
    %12 = arith.addf %11, %5 : vector<128x128xf32>
    %cst = arith.constant 0.000000e+00 : f32
    %13 = vector.broadcast %cst : f32 to vector<128x128xf32>
    %14 = arith.maximumf %12, %13 : vector<128x128xf32>
    %15 = tpu.transpose %14, [1, 0] : vector<128x128xf32> -> vector<128x128xf32>
    %c0_6 = arith.constant 0 : index
    %c0_7 = arith.constant 0 : index
    %c0_8 = arith.constant 0 : index
    %16 = vector.load %arg5[%c0_6, %c0_7, %c0_8] : memref<1x128x128xf32, #tpu.memory_space<vmem>>, vector<1x128x128xf32>
    %17 = vector.shape_cast %16 : vector<1x128x128xf32> to vector<128x128xf32>
    %18 = vector.shape_cast %15 : vector<128x128xf32> to vector<1x128x128xf32>
    tpu.vector_store %arg5[%c0_6, %c0_7, %c0_8], %18 {strides = array<i32>} : memref<1x128x128xf32, #tpu.memory_space<vmem>>, vector<1x128x128xf32>,
    return
  }
  func.func @transform_0(%arg0: i32, %arg1: i32) -> (i32, i32, i32) {
    %c0_i32 = arith.constant 0 : i32
    %c0_i32_0 = arith.constant 0 : i32
    return %arg0, %arg1, %c0_i32 : i32, i32, i32
  }
  func.func @transform_1(%arg0: i32, %arg1: i32) -> (i32, i32) {
    %c0_i32 = arith.constant 0 : i32
    %c0_i32_0 = arith.constant 0 : i32
    %c0_i32_1 = arith.constant 0 : i32
    return %c0_i32, %c0_i32_0 : i32, i32
  }
  func.func @transform_2(%arg0: i32, %arg1: i32) -> (i32, i32) {
    %c0_i32 = arith.constant 0 : i32
    %c0_i32_0 = arith.constant 0 : i32
    %c0_i32_1 = arith.constant 0 : i32
    return %c0_i32, %c0_i32_0 : i32, i32
  }
  func.func @transform_3(%arg0: i32, %arg1: i32) -> (i32, i32, i32) {
    %c0_i32 = arith.constant 0 : i32
    %c0_i32_0 = arith.constant 0 : i32
    return %arg0, %c0_i32, %arg1 : i32, i32, i32
  }
}

</mosaic_0001>

<llo_original>
// kernel: conv_norm_relu_1d.3
$region0: #{conv_norm_relu_1d.3}
  #allocation0 [shape = 'u32[]', space=smem, size = 0x4, offset = 0x4, fixed_abs, tag = 'smem constant byte address 0x4 - core index']
  #allocation1 [shape = 'u32[72,128]{1,0:T(1,128)}', space=vmem, size = 0x9000, scoped, tag = 'internal scratch']
  %s0 = inlined_call_operand.vmem [shape: bf16[2,128,256], index: 0, kind: input, shape index: {}]
  %s1 = inlined_call_operand.vmem [shape: f32[1,128], index: 1, kind: input, shape index: {}]
  %s2 = inlined_call_operand.vmem [shape: f32[1,128], index: 2, kind: input, shape index: {}]
  %s3 = inlined_call_operand.vmem [shape: f32[2,128,128], index: 3, kind: output, shape index: {}]
  %s4 = sld [smem:[#allocation0]]
  $region45: #{conv_norm_relu_1d.3} parent=0
    _
  %s6 = ssub.s32 1, %s4
  %s7 = scalar_select 0, %s6, %s4
  loop: start=0, step=1, limit=4
  $region2: #{conv_norm_relu_1d.3} parent=0 // loop_pre_header
    _
  $region3: #{conv_norm_relu_1d.3} parent=0 // loop_header
    %s9 = sphi 0, %s13
    %p10 = scmp.ge.s32.totalorder %s9, 4
    %s16 = sphi 0, %s28
    %s17 = sphi 0, %s24
    %s18 = sphi 0, %s16
    %s19 = sphi 0, %s17
    %s20 = sphi 0, %s18
    %s21 = sphi 0, %s19
    %s33 = sphi 0, %s35
    %s36 = sphi 0, %s33
    %s37 = sphi 0, %s36
    %s53 = sphi 0, %s37
    %s57 = sphi 0, %s57
    %s59 = sphi 0, %s57
    %s60 = sphi 0, %s59
    %s74 = sphi 0, %s60
    %s78 = sphi 0, %s78
    %s80 = sphi 0, %s78
    %s81 = sphi 0, %s80
    %s95 = sphi 0, %s81
    %s103 = sphi 0, %s105
    %s106 = sphi 0, %s103
    %s107 = sphi 0, %s106
    %s123 = sphi 0, %s107
  $region4: #{conv_norm_relu_1d.3} parent=0 // loop_header_branch
    %12 = sbr.rel (%p10) target = $region8
  $region5: #{conv_norm_relu_1d.3} parent=0 // loop_body
    %s14 = ssub.s32 %s9, 1
    %s15 = ssub.s32 %s9, 2
    %s22 = sadd.s32 1, %s17
    %p23 = scmp.ge.s32.totalorder %s22, 1
    %s24 = scalar_select %p23, 0, %s22
    %s25 = sadd.s32 1, %s16
    %s26 = scalar_select %p23, %s25, %s16
    %p27 = scmp.ge.s32.totalorder %s26, 2
    %s28 = scalar_select %p27, 0, %s26
    %s29 = ssub.s32 %s16, %s28
    %s30 = ssub.s32 %s17, %s24
    %s31 = sor.u32 %s29, %s30
    %p32 = scmp.eq.s32.totalorder %s31, 0
    %s34 = sadd.s32 %s33, 1
    %s35 = scalar_select %p32, %s33, %s34
    %p38 = pneg %p32
    %p39 = scmp.eq.s32.totalorder %s9, 1
    %p40 = por %p38, %p39
    %p41 = scmp.ne.s32.totalorder %s33, %s36
    %p42 = scmp.eq.s32.totalorder %s9, 0
    %p43 = por %p41, %p42
    %p44 = scmp.ne.s32.totalorder %s33, %s36
    %p45 = scmp.eq.s32.totalorder %s14, 1
    %p46 = por %p44, %p45
    %p47 = scmp.ne.s32.totalorder %s36, %s37
    %p48 = scmp.eq.s32.totalorder %s14, 0
    %p49 = por %p47, %p48
    %p50 = scmp.ne.s32.totalorder %s36, %s37
    %p51 = scmp.eq.s32.totalorder %s15, 1
    %p52 = por %p50, %p51
    %p54 = scmp.ne.s32.totalorder %s37, %s53
    %p55 = scmp.eq.s32.totalorder %s15, 0
    %p56 = por %p54, %p55
    %s58 = sadd.s32 %s57, 1
    %p61 = scmp.eq.s32.totalorder %s9, 1
    %p62 = scmp.ne.s32.totalorder %s57, %s59
    %p63 = scmp.eq.s32.totalorder %s9, 0
    %p64 = por %p62, %p63
    %p65 = scmp.ne.s32.totalorder %s57, %s59
    %p66 = scmp.eq.s32.totalorder %s14, 1
    %p67 = por %p65, %p66
    %p68 = scmp.ne.s32.totalorder %s59, %s60
    %p69 = scmp.eq.s32.totalorder %s14, 0
    %p70 = por %p68, %p69
    %p71 = scmp.ne.s32.totalorder %s59, %s60
    %p72 = scmp.eq.s32.totalorder %s15, 1
    %p73 = por %p71, %p72
    %p75 = scmp.ne.s32.totalorder %s60, %s74
    %p76 = scmp.eq.s32.totalorder %s15, 0
    %p77 = por %p75, %p76
    %s79 = sadd.s32 %s78, 1
    %p82 = scmp.eq.s32.totalorder %s9, 1
    %p83 = scmp.ne.s32.totalorder %s78, %s80
    %p84 = scmp.eq.s32.totalorder %s9, 0
    %p85 = por %p83, %p84
    %p86 = scmp.ne.s32.totalorder %s78, %s80
    %p87 = scmp.eq.s32.totalorder %s14, 1
    %p88 = por %p86, %p87
    %p89 = scmp.ne.s32.totalorder %s80, %s81
    %p90 = scmp.eq.s32.totalorder %s14, 0
    %p91 = por %p89, %p90
    %p92 = scmp.ne.s32.totalorder %s80, %s81
    %p93 = scmp.eq.s32.totalorder %s15, 1
    %p94 = por %p92, %p93
    %p96 = scmp.ne.s32.totalorder %s81, %s95
    %p97 = scmp.eq.s32.totalorder %s15, 0
    %p98 = por %p96, %p97
    %s99 = ssub.s32 %s16, %s28
    %s100 = ssub.s32 %s17, %s24
    %s101 = sor.u32 %s99, %s100
    %p102 = scmp.eq.s32.totalorder %s101, 0
    %s104 = sadd.s32 %s103, 1
    %s105 = scalar_select %p102, %s103, %s104
    %p108 = pneg %p102
    %p109 = scmp.eq.s32.totalorder %s9, 1
    %p110 = por %p108, %p109
    %p111 = scmp.ne.s32.totalorder %s103, %s106
    %p112 = scmp.eq.s32.totalorder %s9, 0
    %p113 = por %p111, %p112
    %p114 = scmp.ne.s32.totalorder %s103, %s106
    %p115 = scmp.eq.s32.totalorder %s14, 1
    %p116 = por %p114, %p115
    %p117 = scmp.ne.s32.totalorder %s106, %s107
    %p118 = scmp.eq.s32.totalorder %s14, 0
    %p119 = por %p117, %p118
    %p120 = scmp.ne.s32.totalorder %s106, %s107
    %p121 = scmp.eq.s32.totalorder %s15, 1
    %p122 = por %p120, %p121
    %p124 = scmp.ne.s32.totalorder %s107, %s123
    %p125 = scmp.eq.s32.totalorder %s15, 0
    %p126 = por %p124, %p125
    %p127 = scmp.le.s32.totalorder 1, %s9
    %p128 = scmp.lt.s32.totalorder %s9, 3
    %p129 = pnand %p127, %p128
    %p130 = pneg %p129
    // Predicated region
    $region9: #{conv_norm_relu_1d.3} parent=5 // pred_check
      _
    $region10: #{conv_norm_relu_1d.3} parent=5 // pred_check_branch
      %132 = sbr.rel (%p129) target = $region12
    $region11: #{conv_norm_relu_1d.3} parent=5 // pred_region
      %s133 = ssub.s32 %s9, 1
      // Predicated region
      $region13: #{conv_norm_relu_1d.3} parent=11 // pred_check
        %p134 = pneg %p70
      $region14: #{conv_norm_relu_1d.3} parent=11 // pred_check_branch
        %136 = sbr.rel (%p134) target = $region16
      $region15: #{conv_norm_relu_1d.3} parent=11 // pred_region
        _
      $region16: #{conv_norm_relu_1d.3} parent=11 // pred_fallthru
        _
      // Predicated region
      $region17: #{conv_norm_relu_1d.3} parent=11 // pred_check
        %p137 = pneg %p91
      $region18: #{conv_norm_relu_1d.3} parent=11 // pred_check_branch
        %139 = sbr.rel (%p137) target = $region20
      $region19: #{conv_norm_relu_1d.3} parent=11 // pred_region
        _
      $region20: #{conv_norm_relu_1d.3} parent=11 // pred_fallthru
        _
    $region12: #{conv_norm_relu_1d.3} parent=5 // pred_fallthru
      _
    %p140 = scmp.lt.s32.totalorder %s9, 2
    // Predicated region
    $region21: #{conv_norm_relu_1d.3} parent=5 // pred_check
      %p141 = pneg %p140
    $region22: #{conv_norm_relu_1d.3} parent=5 // pred_check_branch
      %143 = sbr.rel (%p141) target = $region24
    $region23: #{conv_norm_relu_1d.3} parent=5 // pred_region
      // Predicated region
      $region25: #{conv_norm_relu_1d.3} parent=23 // pred_check
        %p144 = pneg %p43
      $region26: #{conv_norm_relu_1d.3} parent=23 // pred_check_branch
        %146 = sbr.rel (%p144) target = $region28
      $region27: #{conv_norm_relu_1d.3} parent=23 // pred_region
        %s147 = smul.u32 16, %s17
        %p148 = scmp.lt.s32.totalorder %s16, 1
        %s149 = scalar_select %p148, %s16, 1
        %p150 = scmp.lt.s32.totalorder %s147, 15
        %s151 = scalar_select %p150, %s147, 15
        %s152 = smul.addr %s151, 2
        %s153 = smul.addr %s149, 32
        %s154 = sadd.s32 %s152, %s153
        %s155 = smul.addr %s154, 4
        %s156 = scalar_lea.vmem %s0, %s155
        %s157 = smul.u32 16, %s17
      $region28: #{conv_norm_relu_1d.3} parent=23 // pred_fallthru
        _
    $region24: #{conv_norm_relu_1d.3} parent=5 // pred_fallthru
      _
    %p158 = scmp.le.s32.totalorder 1, %s9
    %p159 = scmp.lt.s32.totalorder %s9, 3
    %p160 = pnand %p158, %p159
    %p161 = pneg %p160
    // Predicated region
    $region29: #{conv_norm_relu_1d.3} parent=5 // pred_check
      _
    $region30: #{conv_norm_relu_1d.3} parent=5 // pred_check_branch
      %163 = sbr.rel (%p160) target = $region32
    $region31: #{conv_norm_relu_1d.3} parent=5 // pred_region
      %s164 = ssub.s32 %s9, 1
      %s165 = smul.u32 16, %s19
      %p166 = scmp.lt.s32.totalorder %s18, 1
      %s167 = scalar_select %p166, %s18, 1
      %p168 = scmp.lt.s32.totalorder %s165, 15
      %s169 = scalar_select %p168, %s165, 15
      %s170 = smul.addr %s169, 2
      %s171 = smul.addr %s167, 32
      %s172 = sadd.s32 %s170, %s171
      %s173 = smul.addr %s172, 4
      %s174 = scalar_lea.vmem %s0, %s173
      %p175 = pneg %p49
      %p176 = pneg %p46
      %p177 = pneg %p70
      %p178 = pneg %p67
      %p179 = pneg %p91
      %p180 = pneg %p88
      %p181 = pneg %p119
      %p182 = pneg %p116
      %p183 = scmp.lt.s32.totalorder %s18, 1
      %s184 = scalar_select %p183, %s18, 1
      %p185 = scmp.lt.s32.totalorder %s19, 0
      %s186 = scalar_select %p185, %s19, 0
      %s187 = smul.addr %s184, 16
      %s188 = sadd.s32 %s186, %s187
      %s189 = smul.addr %s188, 8
      %s190 = scalar_lea.vmem %s3, %s189
      %s191 = smul.u32 16, %s19
      %p192 = scmp.lt.s32.totalorder %s18, 1
      %s193 = scalar_select %p192, %s18, 1
      %p194 = scmp.lt.s32.totalorder %s191, 15
      %s195 = scalar_select %p194, %s191, 15
      %s196 = smul.addr %s195, 2
      %s197 = smul.addr %s193, 32
      %s198 = sadd.s32 %s196, %s197
      %s199 = smul.addr %s198, 4
      %s200 = scalar_lea.vmem %s0, %s199
      %s201 = smul.u32 16, %s19
      %p202 = scmp.lt.s32.totalorder %s18, 1
      %s203 = scalar_select %p202, %s18, 1
      %p204 = scmp.lt.s32.totalorder %s19, 0
      %s205 = scalar_select %p204, %s19, 0
      %s206 = smul.addr %s203, 16
      %s207 = sadd.s32 %s205, %s206
      %s208 = smul.addr %s207, 8
      %s209 = scalar_lea.vmem %s3, %s208
      %v210 = vld [vmem:[%s200] sm:$0xff]
      %v211 = vld [vmem:[%s200 + $0x8] sm:$0xff]
      %v212 = vld [vmem:[%s200 + $0x10] sm:$0xff]
      %v213 = vld [vmem:[%s200 + $0x18] sm:$0xff]
      %v214 = vld [vmem:[%s200 + $0x20] sm:$0xff]
      %v215 = vld [vmem:[%s200 + $0x28] sm:$0xff]
      %v216 = vld [vmem:[%s200 + $0x30] sm:$0xff]
      %v217 = vld [vmem:[%s200 + $0x38] sm:$0xff]
      %v218 = vld [vmem:[%s200 + $0x40] sm:$0xff]
      %v219 = vld [vmem:[%s200 + $0x48] sm:$0xff]
      %v220 = vld [vmem:[%s200 + $0x50] sm:$0xff]
      %v221 = vld [vmem:[%s200 + $0x58] sm:$0xff]
      %v222 = vld [vmem:[%s200 + $0x60] sm:$0xff]
      %v223 = vld [vmem:[%s200 + $0x68] sm:$0xff]
      %v224 = vld [vmem:[%s200 + $0x70] sm:$0xff]
      %v225 = vld [vmem:[%s200 + $0x78] sm:$0xff]
      %v226 = vunpack.c.l.bf16 %v210
      %v227 = vunpack.c.l.bf16 %v211
      %v228 = vunpack.c.l.bf16 %v212
      %v229 = vunpack.c.l.bf16 %v213
      %v230 = vunpack.c.l.bf16 %v214
      %v231 = vunpack.c.l.bf16 %v215
      %v232 = vunpack.c.l.bf16 %v216
      %v233 = vunpack.c.l.bf16 %v217
      %v234 = vunpack.c.l.bf16 %v218
      %v235 = vunpack.c.l.bf16 %v219
      %v236 = vunpack.c.l.bf16 %v220
      %v237 = vunpack.c.l.bf16 %v221
      %v238 = vunpack.c.l.bf16 %v222
      %v239 = vunpack.c.l.bf16 %v223
      %v240 = vunpack.c.l.bf16 %v224
      %v241 = vunpack.c.l.bf16 %v225
      %v258 = vrot.slane %v210, 4
      %v259 = vrot.slane %v211, 4
      %v260 = vrot.slane %v212, 4
      %v261 = vrot.slane %v213, 4
      %v262 = vrot.slane %v214, 4
      %v263 = vrot.slane %v215, 4
      %v264 = vrot.slane %v216, 4
      %v265 = vrot.slane %v217, 4
      %v266 = vrot.slane %v218, 4
      %v267 = vrot.slane %v219, 4
      %v268 = vrot.slane %v220, 4
      %v269 = vrot.slane %v221, 4
      %v270 = vrot.slane %v222, 4
      %v271 = vrot.slane %v223, 4
      %v272 = vrot.slane %v224, 4
      %v273 = vrot.slane %v225, 4
      %v290 = vunpack.c.l.bf16 %v258
      %v291 = vunpack.c.l.bf16 %v259
      %v292 = vunpack.c.l.bf16 %v260
      %v293 = vunpack.c.l.bf16 %v261
      %v294 = vunpack.c.l.bf16 %v262
      %v295 = vunpack.c.l.bf16 %v263
      %v296 = vunpack.c.l.bf16 %v264
      %v297 = vunpack.c.l.bf16 %v265
      %v298 = vunpack.c.l.bf16 %v266
      %v299 = vunpack.c.l.bf16 %v267
      %v300 = vunpack.c.l.bf16 %v268
      %v301 = vunpack.c.l.bf16 %v269
      %v302 = vunpack.c.l.bf16 %v270
      %v303 = vunpack.c.l.bf16 %v271
      %v304 = vunpack.c.l.bf16 %v272
      %v305 = vunpack.c.l.bf16 %v273
      %v306 = vld [vmem:[%s1] sm:$0x1]
      %v308 = vperm.slane %v306, 0
      %v310 = vmul.f32 %v226, %v308
      %v311 = vmul.f32 %v227, %v308
      %v312 = vmul.f32 %v228, %v308
      %v313 = vmul.f32 %v229, %v308
      %v314 = vmul.f32 %v230, %v308
      %v315 = vmul.f32 %v231, %v308
      %v316 = vmul.f32 %v232, %v308
      %v317 = vmul.f32 %v233, %v308
      %v318 = vmul.f32 %v234, %v308
      %v319 = vmul.f32 %v235, %v308
      %v320 = vmul.f32 %v236, %v308
      %v321 = vmul.f32 %v237, %v308
      %v322 = vmul.f32 %v238, %v308
      %v323 = vmul.f32 %v239, %v308
      %v324 = vmul.f32 %v240, %v308
      %v325 = vmul.f32 %v241, %v308
      %v326 = vld [vmem:[%s2] sm:$0x1]
      %v328 = vperm.slane %v326, 0
      %v330 = vadd.f32 %v310, %v328
      %v331 = vadd.f32 %v311, %v328
      %v332 = vadd.f32 %v312, %v328
      %v333 = vadd.f32 %v313, %v328
      %v334 = vadd.f32 %v314, %v328
      %v335 = vadd.f32 %v315, %v328
      %v336 = vadd.f32 %v316, %v328
      %v337 = vadd.f32 %v317, %v328
      %v338 = vadd.f32 %v318, %v328
      %v339 = vadd.f32 %v319, %v328
      %v340 = vadd.f32 %v320, %v328
      %v341 = vadd.f32 %v321, %v328
      %v342 = vadd.f32 %v322, %v328
      %v343 = vadd.f32 %v323, %v328
      %v344 = vadd.f32 %v324, %v328
      %v345 = vadd.f32 %v325, %v328
      %v346 = vadd.f32 %v330, %v290
      %v347 = vadd.f32 %v331, %v291
      %v348 = vadd.f32 %v332, %v292
      %v349 = vadd.f32 %v333, %v293
      %v350 = vadd.f32 %v334, %v294
      %v351 = vadd.f32 %v335, %v295
      %v352 = vadd.f32 %v336, %v296
      %v353 = vadd.f32 %v337, %v297
      %v354 = vadd.f32 %v338, %v298
      %v355 = vadd.f32 %v339, %v299
      %v356 = vadd.f32 %v340, %v300
      %v357 = vadd.f32 %v341, %v301
      %v358 = vadd.f32 %v342, %v302
      %v359 = vadd.f32 %v343, %v303
      %v360 = vadd.f32 %v344, %v304
      %v361 = vadd.f32 %v345, %v305
      %v362 = vmax.f32 %v346, 0.0
      %v363 = vmax.f32 %v347, 0.0
      %v364 = vmax.f32 %v348, 0.0
      %v365 = vmax.f32 %v349, 0.0
      %v366 = vmax.f32 %v350, 0.0
      %v367 = vmax.f32 %v351, 0.0
      %v368 = vmax.f32 %v352, 0.0
      %v369 = vmax.f32 %v353, 0.0
      %v370 = vmax.f32 %v354, 0.0
      %v371 = vmax.f32 %v355, 0.0
      %v372 = vmax.f32 %v356, 0.0
      %v373 = vmax.f32 %v357, 0.0
      %v374 = vmax.f32 %v358, 0.0
      %v375 = vmax.f32 %v359, 0.0
      %v376 = vmax.f32 %v360, 0.0
      %v377 = vmax.f32 %v361, 0.0
      %378 = vxpose.xlu0.b32.start [1/16] %v362, 128
      %379 = vxpose.xlu0.b32.cont [2/16] %v363, 128
      %380 = vxpose.xlu0.b32.cont [3/16] %v364, 128
      %381 = vxpose.xlu0.b32.cont [4/16] %v365, 128
      %382 = vxpose.xlu0.b32.cont [5/16] %v366, 128
      %383 = vxpose.xlu0.b32.cont [6/16] %v367, 128
      %384 = vxpose.xlu0.b32.cont [7/16] %v368, 128
      %385 = vxpose.xlu0.b32.cont [8/16] %v369, 128
      %386 = vxpose.xlu0.b32.cont [9/16] %v370, 128
      %387 = vxpose.xlu0.b32.cont [10/16] %v371, 128
      %388 = vxpose.xlu0.b32.cont [11/16] %v372, 128
      %389 = vxpose.xlu0.b32.cont [12/16] %v373, 128
      %390 = vxpose.xlu0.b32.cont [13/16] %v374, 128
      %391 = vxpose.xlu0.b32.cont [14/16] %v375, 128
      %392 = vxpose.xlu0.b32.cont [15/16] %v376, 128
      %393 = vxpose.xlu0.b32.end [16/16] %v377, 128
      %v394 = vpop.trf.xlu0
      %v395 = vpop.trf.xlu0
      %v396 = vpop.trf.xlu0
      %v397 = vpop.trf.xlu0
      %v398 = vpop.trf.xlu0
      %v399 = vpop.trf.xlu0
      %v400 = vpop.trf.xlu0
      %v401 = vpop.trf.xlu0
      %v402 = vpop.trf.xlu0
      %v403 = vpop.trf.xlu0
      %v404 = vpop.trf.xlu0
      %v405 = vpop.trf.xlu0
      %v406 = vpop.trf.xlu0
      %v407 = vpop.trf.xlu0
      %v408 = vpop.trf.xlu0
      %v409 = vpop.trf.xlu0
      %410 = vst [vmem:[%s209] sm:$0xff] %v394
      %411 = vst [vmem:[%s209 + $0x8] sm:$0xff] %v395
      %412 = vst [vmem:[%s209 + $0x10] sm:$0xff] %v396
      %413 = vst [vmem:[%s209 + $0x18] sm:$0xff] %v397
      %414 = vst [vmem:[%s209 + $0x20] sm:$0xff] %v398
      %415 = vst [vmem:[%s209 + $0x28] sm:$0xff] %v399
      %416 = vst [vmem:[%s209 + $0x30] sm:$0xff] %v400
      %417 = vst [vmem:[%s209 + $0x38] sm:$0xff] %v401
      %418 = vst [vmem:[%s209 + $0x40] sm:$0xff] %v402
      %419 = vst [vmem:[%s209 + $0x48] sm:$0xff] %v403
      %420 = vst [vmem:[%s209 + $0x50] sm:$0xff] %v404
      %421 = vst [vmem:[%s209 + $0x58] sm:$0xff] %v405
      %422 = vst [vmem:[%s209 + $0x60] sm:$0xff] %v406
      %423 = vst [vmem:[%s209 + $0x68] sm:$0xff] %v407
      %424 = vst [vmem:[%s209 + $0x70] sm:$0xff] %v408
      %425 = vst [vmem:[%s209 + $0x78] sm:$0xff] %v409
      %p426 = scmp.lt.s32.totalorder %s18, 1
      %s427 = scalar_select %p426, %s18, 1
      %p428 = scmp.lt.s32.totalorder %s19, 0
      %s429 = scalar_select %p428, %s19, 0
      %s430 = smul.addr %s427, 16
      %s431 = sadd.s32 %s429, %s430
      %s432 = smul.addr %s431, 8
      %s433 = scalar_lea.vmem %s3, %s432
      // Predicated region
      $region33: #{conv_norm_relu_1d.3} parent=31 // pred_check
        %p434 = pneg %p116
      $region34: #{conv_norm_relu_1d.3} parent=31 // pred_check_branch
        %436 = sbr.rel (%p434) target = $region36
      $region35: #{conv_norm_relu_1d.3} parent=31 // pred_region
        _
      $region36: #{conv_norm_relu_1d.3} parent=31 // pred_fallthru
        _
    $region32: #{conv_norm_relu_1d.3} parent=5 // pred_fallthru
      _
    %p437 = scmp.le.s32.totalorder 2, %s9
    // Predicated region
    $region37: #{conv_norm_relu_1d.3} parent=5 // pred_check
      %p438 = pneg %p437
    $region38: #{conv_norm_relu_1d.3} parent=5 // pred_check_branch
      %440 = sbr.rel (%p438) target = $region40
    $region39: #{conv_norm_relu_1d.3} parent=5 // pred_region
      %s441 = ssub.s32 %s9, 2
      // Predicated region
      $region41: #{conv_norm_relu_1d.3} parent=39 // pred_check
        %p442 = pneg %p122
      $region42: #{conv_norm_relu_1d.3} parent=39 // pred_check_branch
        %444 = sbr.rel (%p442) target = $region44
      $region43: #{conv_norm_relu_1d.3} parent=39 // pred_region
        %p445 = scmp.lt.s32.totalorder %s20, 1
        %s446 = scalar_select %p445, %s20, 1
        %p447 = scmp.lt.s32.totalorder %s21, 0
        %s448 = scalar_select %p447, %s21, 0
        %s449 = smul.addr %s446, 16
        %s450 = sadd.s32 %s448, %s449
        %s451 = smul.addr %s450, 8
        %s452 = scalar_lea.vmem %s3, %s451
      $region44: #{conv_norm_relu_1d.3} parent=39 // pred_fallthru
        _
    $region40: #{conv_norm_relu_1d.3} parent=5 // pred_fallthru
      _
  $region6: #{conv_norm_relu_1d.3} parent=0 // loop_footer
    %s13 = sadd.s32 1, %s9
  $region7: #{conv_norm_relu_1d.3} parent=0 // loop_footer_branch
    %8 = sbr.rel target = $region3
  $region8: #{conv_norm_relu_1d.3} parent=0 // loop_exit
    _

// kernel: conv_norm_relu_1d.2
$region0: #{conv_norm_relu_1d.2}
  #allocation0 [shape = 'u32[]', space=smem, size = 0x4, offset = 0x4, fixed_abs, tag = 'smem constant byte address 0x4 - core index']
  #allocation1 [shape = 'u32[72,128]{1,0:T(1,128)}', space=vmem, size = 0x9000, scoped, tag = 'internal scratch']
  %s0 = inlined_call_operand.vmem [shape: bf16[2,1,128,128], index: 0, kind: input, shape index: {}]
  %s1 = inlined_call_operand.vmem [shape: bf16[1,128,256], index: 1, kind: input, shape index: {}]
  %s2 = inlined_call_operand.vmem [shape: bf16[2,128,256], index: 2, kind: output, shape index: {0}]
  %s3 = inlined_call_operand.vmem [shape: f32[2,1,2,128], index: 3, kind: output, shape index: {1}]
  %4 = xla_tuple %s2, %s3
  %s5 = sld [smem:[#allocation0]]
  $region57: #{conv_norm_relu_1d.2} parent=0
    _
  %s7 = ssub.s32 1, %s5
  %s8 = scalar_select 0, %s7, %s5
  loop: start=0, step=1, limit=4
  $region2: #{conv_norm_relu_1d.2} parent=0 // loop_pre_header
    _
  $region3: #{conv_norm_relu_1d.2} parent=0 // loop_header
    %s10 = sphi 0, %s14
    %p11 = scmp.ge.s32.totalorder %s10, 4
    %s17 = sphi 0, %s29
    %s18 = sphi 0, %s25
    %s19 = sphi 0, %s17
    %s20 = sphi 0, %s18
    %s21 = sphi 0, %s19
    %s22 = sphi 0, %s20
    %s34 = sphi 0, %s36
    %s37 = sphi 0, %s34
    %s38 = sphi 0, %s37
    %s54 = sphi 0, %s38
    %s58 = sphi 0, %s58
    %s60 = sphi 0, %s58
    %s61 = sphi 0, %s60
    %s75 = sphi 0, %s61
    %s83 = sphi 0, %s85
    %s86 = sphi 0, %s83
    %s87 = sphi 0, %s86
    %s103 = sphi 0, %s87
    %s111 = sphi 0, %s113
    %s114 = sphi 0, %s111
    %s115 = sphi 0, %s114
    %s131 = sphi 0, %s115
  $region4: #{conv_norm_relu_1d.2} parent=0 // loop_header_branch
    %13 = sbr.rel (%p11) target = $region8
  $region5: #{conv_norm_relu_1d.2} parent=0 // loop_body
    %s15 = ssub.s32 %s10, 1
    %s16 = ssub.s32 %s10, 2
    %s23 = sadd.s32 1, %s18
    %p24 = scmp.ge.s32.totalorder %s23, 1
    %s25 = scalar_select %p24, 0, %s23
    %s26 = sadd.s32 1, %s17
    %s27 = scalar_select %p24, %s26, %s17
    %p28 = scmp.ge.s32.totalorder %s27, 2
    %s29 = scalar_select %p28, 0, %s27
    %s30 = ssub.s32 %s17, %s29
    %s31 = ssub.s32 %s18, %s25
    %s32 = sor.u32 %s30, %s31
    %p33 = scmp.eq.s32.totalorder %s32, 0
    %s35 = sadd.s32 %s34, 1
    %s36 = scalar_select %p33, %s34, %s35
    %p39 = pneg %p33
    %p40 = scmp.eq.s32.totalorder %s10, 1
    %p41 = por %p39, %p40
    %p42 = scmp.ne.s32.totalorder %s34, %s37
    %p43 = scmp.eq.s32.totalorder %s10, 0
    %p44 = por %p42, %p43
    %p45 = scmp.ne.s32.totalorder %s34, %s37
    %p46 = scmp.eq.s32.totalorder %s15, 1
    %p47 = por %p45, %p46
    %p48 = scmp.ne.s32.totalorder %s37, %s38
    %p49 = scmp.eq.s32.totalorder %s15, 0
    %p50 = por %p48, %p49
    %p51 = scmp.ne.s32.totalorder %s37, %s38
    %p52 = scmp.eq.s32.totalorder %s16, 1
    %p53 = por %p51, %p52
    %p55 = scmp.ne.s32.totalorder %s38, %s54
    %p56 = scmp.eq.s32.totalorder %s16, 0
    %p57 = por %p55, %p56
    %s59 = sadd.s32 %s58, 1
    %p62 = scmp.eq.s32.totalorder %s10, 1
    %p63 = scmp.ne.s32.totalorder %s58, %s60
    %p64 = scmp.eq.s32.totalorder %s10, 0
    %p65 = por %p63, %p64
    %p66 = scmp.ne.s32.totalorder %s58, %s60
    %p67 = scmp.eq.s32.totalorder %s15, 1
    %p68 = por %p66, %p67
    %p69 = scmp.ne.s32.totalorder %s60, %s61
    %p70 = scmp.eq.s32.totalorder %s15, 0
    %p71 = por %p69, %p70
    %p72 = scmp.ne.s32.totalorder %s60, %s61
    %p73 = scmp.eq.s32.totalorder %s16, 1
    %p74 = por %p72, %p73
    %p76 = scmp.ne.s32.totalorder %s61, %s75
    %p77 = scmp.eq.s32.totalorder %s16, 0
    %p78 = por %p76, %p77
    %s79 = ssub.s32 %s17, %s29
    %s80 = ssub.s32 %s18, %s25
    %s81 = sor.u32 %s79, %s80
    %p82 = scmp.eq.s32.totalorder %s81, 0
    %s84 = sadd.s32 %s83, 1
    %s85 = scalar_select %p82, %s83, %s84
    %p88 = pneg %p82
    %p89 = scmp.eq.s32.totalorder %s10, 1
    %p90 = por %p88, %p89
    %p91 = scmp.ne.s32.totalorder %s83, %s86
    %p92 = scmp.eq.s32.totalorder %s10, 0
    %p93 = por %p91, %p92
    %p94 = scmp.ne.s32.totalorder %s83, %s86
    %p95 = scmp.eq.s32.totalorder %s15, 1
    %p96 = por %p94, %p95
    %p97 = scmp.ne.s32.totalorder %s86, %s87
    %p98 = scmp.eq.s32.totalorder %s15, 0
    %p99 = por %p97, %p98
    %p100 = scmp.ne.s32.totalorder %s86, %s87
    %p101 = scmp.eq.s32.totalorder %s16, 1
    %p102 = por %p100, %p101
    %p104 = scmp.ne.s32.totalorder %s87, %s103
    %p105 = scmp.eq.s32.totalorder %s16, 0
    %p106 = por %p104, %p105
    %s107 = ssub.s32 %s17, %s29
    %s108 = ssub.s32 %s18, %s25
    %s109 = sor.u32 %s107, %s108
    %p110 = scmp.eq.s32.totalorder %s109, 0
    %s112 = sadd.s32 %s111, 1
    %s113 = scalar_select %p110, %s111, %s112
    %p116 = pneg %p110
    %p117 = scmp.eq.s32.totalorder %s10, 1
    %p118 = por %p116, %p117
    %p119 = scmp.ne.s32.totalorder %s111, %s114
    %p120 = scmp.eq.s32.totalorder %s10, 0
    %p121 = por %p119, %p120
    %p122 = scmp.ne.s32.totalorder %s111, %s114
    %p123 = scmp.eq.s32.totalorder %s15, 1
    %p124 = por %p122, %p123
    %p125 = scmp.ne.s32.totalorder %s114, %s115
    %p126 = scmp.eq.s32.totalorder %s15, 0
    %p127 = por %p125, %p126
    %p128 = scmp.ne.s32.totalorder %s114, %s115
    %p129 = scmp.eq.s32.totalorder %s16, 1
    %p130 = por %p128, %p129
    %p132 = scmp.ne.s32.totalorder %s115, %s131
    %p133 = scmp.eq.s32.totalorder %s16, 0
    %p134 = por %p132, %p133
    %p135 = scmp.le.s32.totalorder 1, %s10
    %p136 = scmp.lt.s32.totalorder %s10, 3
    %p137 = pnand %p135, %p136
    %p138 = pneg %p137
    // Predicated region
    $region9: #{conv_norm_relu_1d.2} parent=5 // pred_check
      _
    $region10: #{conv_norm_relu_1d.2} parent=5 // pred_check_branch
      %140 = sbr.rel (%p137) target = $region12
    $region11: #{conv_norm_relu_1d.2} parent=5 // pred_region
      %s141 = ssub.s32 %s10, 1
      // Predicated region
      $region13: #{conv_norm_relu_1d.2} parent=11 // pred_check
        %p142 = pneg %p71
      $region14: #{conv_norm_relu_1d.2} parent=11 // pred_check_branch
        %144 = sbr.rel (%p142) target = $region16
      $region15: #{conv_norm_relu_1d.2} parent=11 // pred_region
        _
      $region16: #{conv_norm_relu_1d.2} parent=11 // pred_fallthru
        _
    $region12: #{conv_norm_relu_1d.2} parent=5 // pred_fallthru
      _
    %p145 = scmp.lt.s32.totalorder %s10, 2
    // Predicated region
    $region17: #{conv_norm_relu_1d.2} parent=5 // pred_check
      %p146 = pneg %p145
    $region18: #{conv_norm_relu_1d.2} parent=5 // pred_check_branch
      %148 = sbr.rel (%p146) target = $region20
    $region19: #{conv_norm_relu_1d.2} parent=5 // pred_region
      // Predicated region
      $region21: #{conv_norm_relu_1d.2} parent=19 // pred_check
        %p149 = pneg %p44
      $region22: #{conv_norm_relu_1d.2} parent=19 // pred_check_branch
        %151 = sbr.rel (%p149) target = $region24
      $region23: #{conv_norm_relu_1d.2} parent=19 // pred_region
        %p152 = scmp.lt.s32.totalorder %s17, 1
        %s153 = scalar_select %p152, %s17, 1
        %p154 = scmp.lt.s32.totalorder %s18, 0
        %s155 = scalar_select %p154, %s18, 0
        %s156 = smul.addr %s155, 16
        %s157 = smul.addr %s153, 16
        %s158 = sadd.s32 %s156, %s157
        %s159 = smul.addr %s158, 4
        %s160 = scalar_lea.vmem %s0, %s159
      $region24: #{conv_norm_relu_1d.2} parent=19 // pred_fallthru
        _
    $region20: #{conv_norm_relu_1d.2} parent=5 // pred_fallthru
      _
    %p161 = scmp.le.s32.totalorder 1, %s10
    %p162 = scmp.lt.s32.totalorder %s10, 3
    %p163 = pnand %p161, %p162
    %p164 = pneg %p163
    // Predicated region
    $region25: #{conv_norm_relu_1d.2} parent=5 // pred_check
      _
    $region26: #{conv_norm_relu_1d.2} parent=5 // pred_check_branch
      %166 = sbr.rel (%p163) target = $region28
    $region27: #{conv_norm_relu_1d.2} parent=5 // pred_region
      %s167 = ssub.s32 %s10, 1
      %p168 = scmp.lt.s32.totalorder %s19, 1
      %s169 = scalar_select %p168, %s19, 1
      %p170 = scmp.lt.s32.totalorder %s20, 0
      %s171 = scalar_select %p170, %s20, 0
      %s172 = smul.addr %s171, 16
      %s173 = smul.addr %s169, 16
      %s174 = sadd.s32 %s172, %s173
      %s175 = smul.addr %s174, 4
      %s176 = scalar_lea.vmem %s0, %s175
      %p177 = pneg %p50
      %p178 = pneg %p47
      %p179 = pneg %p71
      %p180 = pneg %p68
      %p181 = pneg %p99
      %p182 = pneg %p96
      %s183 = smul.u32 16, %s20
      %p184 = scmp.lt.s32.totalorder %s19, 1
      %s185 = scalar_select %p184, %s19, 1
      %p186 = scmp.lt.s32.totalorder %s183, 15
      %s187 = scalar_select %p186, %s183, 15
      %s188 = smul.addr %s187, 2
      %s189 = smul.addr %s185, 32
      %s190 = sadd.s32 %s188, %s189
      %s191 = smul.addr %s190, 4
      %s192 = scalar_lea.vmem %s2, %s191
      %p193 = pneg %p127
      %p194 = pneg %p124
      %p195 = scmp.lt.s32.totalorder %s19, 1
      %s196 = scalar_select %p195, %s19, 1
      %p197 = scmp.lt.s32.totalorder %s20, 0
      %s198 = scalar_select %p197, %s20, 0
      %s199 = sadd.s32 %s198, %s196
      %s200 = smul.addr %s199, 2
      %s201 = scalar_lea.vmem %s3, %s200
      %p202 = scmp.lt.s32.totalorder %s19, 1
      %s203 = scalar_select %p202, %s19, 1
      %p204 = scmp.lt.s32.totalorder %s20, 0
      %s205 = scalar_select %p204, %s20, 0
      %s206 = smul.addr %s205, 16
      %s207 = smul.addr %s203, 16
      %s208 = sadd.s32 %s206, %s207
      %s209 = smul.addr %s208, 4
      %s210 = scalar_lea.vmem %s0, %s209
      %s211 = smul.u32 16, %s20
      %p212 = scmp.lt.s32.totalorder %s19, 1
      %s213 = scalar_select %p212, %s19, 1
      %p214 = scmp.lt.s32.totalorder %s211, 15
      %s215 = scalar_select %p214, %s211, 15
      %s216 = smul.addr %s215, 2
      %s217 = smul.addr %s213, 32
      %s218 = sadd.s32 %s216, %s217
      %s219 = smul.addr %s218, 4
      %s220 = scalar_lea.vmem %s2, %s219
      %s221 = smul.u32 16, %s20
      %p222 = scmp.lt.s32.totalorder %s19, 1
      %s223 = scalar_select %p222, %s19, 1
      %p224 = scmp.lt.s32.totalorder %s20, 0
      %s225 = scalar_select %p224, %s20, 0
      %s226 = sadd.s32 %s225, %s223
      %s227 = smul.addr %s226, 2
      %s228 = scalar_lea.vmem %s3, %s227
      %v229 = vld [vmem:[%s210] sm:$0xf]
      %v230 = vld [vmem:[%s210 + $0x4] sm:$0xf]
      %v231 = vld [vmem:[%s210 + $0x8] sm:$0xf]
      %v232 = vld [vmem:[%s210 + $0xc] sm:$0xf]
      %v233 = vld [vmem:[%s210 + $0x10] sm:$0xf]
      %v234 = vld [vmem:[%s210 + $0x14] sm:$0xf]
      %v235 = vld [vmem:[%s210 + $0x18] sm:$0xf]
      %v236 = vld [vmem:[%s210 + $0x1c] sm:$0xf]
      %v237 = vld [vmem:[%s210 + $0x20] sm:$0xf]
      %v238 = vld [vmem:[%s210 + $0x24] sm:$0xf]
      %v239 = vld [vmem:[%s210 + $0x28] sm:$0xf]
      %v240 = vld [vmem:[%s210 + $0x2c] sm:$0xf]
      %v241 = vld [vmem:[%s210 + $0x30] sm:$0xf]
      %v242 = vld [vmem:[%s210 + $0x34] sm:$0xf]
      %v243 = vld [vmem:[%s210 + $0x38] sm:$0xf]
      %v244 = vld [vmem:[%s210 + $0x3c] sm:$0xf]
      %v245 = vld [vmem:[%s1] sm:$0xff]
      %v246 = vld [vmem:[%s1 + $0x8] sm:$0xff]
      %v247 = vld [vmem:[%s1 + $0x10] sm:$0xff]
      %v248 = vld [vmem:[%s1 + $0x18] sm:$0xff]
      %v249 = vld [vmem:[%s1 + $0x20] sm:$0xff]
      %v250 = vld [vmem:[%s1 + $0x28] sm:$0xff]
      %v251 = vld [vmem:[%s1 + $0x30] sm:$0xff]
      %v252 = vld [vmem:[%s1 + $0x38] sm:$0xff]
      %v253 = vld [vmem:[%s1 + $0x40] sm:$0xff]
      %v254 = vld [vmem:[%s1 + $0x48] sm:$0xff]
      %v255 = vld [vmem:[%s1 + $0x50] sm:$0xff]
      %v256 = vld [vmem:[%s1 + $0x58] sm:$0xff]
      %v257 = vld [vmem:[%s1 + $0x60] sm:$0xff]
      %v258 = vld [vmem:[%s1 + $0x68] sm:$0xff]
      %v259 = vld [vmem:[%s1 + $0x70] sm:$0xff]
      %v260 = vld [vmem:[%s1 + $0x78] sm:$0xff]
      %v277 = vunpack.c.l.b16 %v229
      %v278 = vunpack.c.l.b16 %v230
      %v279 = vunpack.c.l.b16 %v231
      %v280 = vunpack.c.l.b16 %v232
      %v281 = vunpack.c.l.b16 %v233
      %v282 = vunpack.c.l.b16 %v234
      %v283 = vunpack.c.l.b16 %v235
      %v284 = vunpack.c.l.b16 %v236
      %v285 = vunpack.c.l.b16 %v237
      %v286 = vunpack.c.l.b16 %v238
      %v287 = vunpack.c.l.b16 %v239
      %v288 = vunpack.c.l.b16 %v240
      %v289 = vunpack.c.l.b16 %v241
      %v290 = vunpack.c.l.b16 %v242
      %v291 = vunpack.c.l.b16 %v243
      %v292 = vunpack.c.l.b16 %v244
      %v293 = vpack.c.b16 %v278, %v277
      %v294 = vpack.c.b16 %v280, %v279
      %v295 = vpack.c.b16 %v282, %v281
      %v296 = vpack.c.b16 %v284, %v283
      %v297 = vpack.c.b16 %v286, %v285
      %v298 = vpack.c.b16 %v288, %v287
      %v299 = vpack.c.b16 %v290, %v289
      %v300 = vpack.c.b16 %v292, %v291
      %v325 = vunpack.c.l.b16 %v245
      %v326 = vunpack.c.h.b16 %v245
      %v327 = vunpack.c.l.b16 %v246
      %v328 = vunpack.c.h.b16 %v246
      %v329 = vunpack.c.l.b16 %v247
      %v330 = vunpack.c.h.b16 %v247
      %v331 = vunpack.c.l.b16 %v248
      %v332 = vunpack.c.h.b16 %v248
      %v333 = vunpack.c.l.b16 %v249
      %v334 = vunpack.c.h.b16 %v249
      %v335 = vunpack.c.l.b16 %v250
      %v336 = vunpack.c.h.b16 %v250
      %v337 = vunpack.c.l.b16 %v251
      %v338 = vunpack.c.h.b16 %v251
      %v339 = vunpack.c.l.b16 %v252
      %v340 = vunpack.c.h.b16 %v252
      %v341 = vunpack.c.l.b16 %v253
      %v342 = vunpack.c.h.b16 %v253
      %v343 = vunpack.c.l.b16 %v254
      %v344 = vunpack.c.h.b16 %v254
      %v345 = vunpack.c.l.b16 %v255
      %v346 = vunpack.c.h.b16 %v255
      %v347 = vunpack.c.l.b16 %v256
      %v348 = vunpack.c.h.b16 %v256
      %v349 = vunpack.c.l.b16 %v257
      %v350 = vunpack.c.h.b16 %v257
      %v351 = vunpack.c.l.b16 %v258
      %v352 = vunpack.c.h.b16 %v258
      %v353 = vunpack.c.l.b16 %v259
      %v354 = vunpack.c.h.b16 %v259
      %v355 = vunpack.c.l.b16 %v260
      %v356 = vunpack.c.h.b16 %v260
      %v357 = vpack.c.b16 %v327, %v325
      %v358 = vpack.c.b16 %v328, %v326
      %v359 = vpack.c.b16 %v331, %v329
      %v360 = vpack.c.b16 %v332, %v330
      %v361 = vpack.c.b16 %v335, %v333
      %v362 = vpack.c.b16 %v336, %v334
      %v363 = vpack.c.b16 %v339, %v337
      %v364 = vpack.c.b16 %v340, %v338
      %v365 = vpack.c.b16 %v343, %v341
      %v366 = vpack.c.b16 %v344, %v342
      %v367 = vpack.c.b16 %v347, %v345
      %v368 = vpack.c.b16 %v348, %v346
      %v369 = vpack.c.b16 %v351, %v349
      %v370 = vpack.c.b16 %v352, %v350
      %v371 = vpack.c.b16 %v355, %v353
      %v372 = vpack.c.b16 %v356, %v354
      %389 = vmatpush.bf16.msra.mxu0 %v371
      %390 = vmatpush.bf16.msra.mxu0 %v369
      %391 = vmatpush.bf16.msra.mxu0 %v367
      %392 = vmatpush.bf16.msra.mxu0 %v365
      %393 = vmatpush.bf16.msra.mxu0 %v363
      %394 = vmatpush.bf16.msra.mxu0 %v361
      %395 = vmatpush.bf16.msra.mxu0 %v359
      %396 = vmatpush.bf16.msra.mxu0 %v357
      %397 = vmatmul.bf16.gmra.mxu0 %v293
      %v398 = vpop.f32.mrf.mxu0
      %v399 = vadd.f32 0.0, %v398
      %v400 = vpop.f32.mrf.mxu0
      %v401 = vadd.f32 0.0, %v400
      %402 = vmatmul.bf16.gmra.mxu0 %v294
      %v403 = vpop.f32.mrf.mxu0
      %v404 = vadd.f32 0.0, %v403
      %v405 = vpop.f32.mrf.mxu0
      %v406 = vadd.f32 0.0, %v405
      %407 = vmatmul.bf16.gmra.mxu0 %v295
      %v408 = vpop.f32.mrf.mxu0
      %v409 = vadd.f32 0.0, %v408
      %v410 = vpop.f32.mrf.mxu0
      %v411 = vadd.f32 0.0, %v410
      %412 = vmatmul.bf16.gmra.mxu0 %v296
      %v413 = vpop.f32.mrf.mxu0
      %v414 = vadd.f32 0.0, %v413
      %v415 = vpop.f32.mrf.mxu0
      %v416 = vadd.f32 0.0, %v415
      %417 = vmatmul.bf16.gmra.mxu0 %v297
      %v418 = vpop.f32.mrf.mxu0
      %v419 = vadd.f32 0.0, %v418
      %v420 = vpop.f32.mrf.mxu0
      %v421 = vadd.f32 0.0, %v420
      %422 = vmatmul.bf16.gmra.mxu0 %v298
      %v423 = vpop.f32.mrf.mxu0
      %v424 = vadd.f32 0.0, %v423
      %v425 = vpop.f32.mrf.mxu0
      %v426 = vadd.f32 0.0, %v425
      %427 = vmatmul.bf16.gmra.mxu0 %v299
      %v428 = vpop.f32.mrf.mxu0
      %v429 = vadd.f32 0.0, %v428
      %v430 = vpop.f32.mrf.mxu0
      %v431 = vadd.f32 0.0, %v430
      %432 = vmatmul.bf16.gmra.mxu0 %v300
      %v433 = vpop.f32.mrf.mxu0
      %v434 = vadd.f32 0.0, %v433
      %v435 = vpop.f32.mrf.mxu0
      %v436 = vadd.f32 0.0, %v435
      %437 = vdwg.mxu0
      %438 = vmatpush.bf16.msra.mxu0 %v372
      %439 = vmatpush.bf16.msra.mxu0 %v370
      %440 = vmatpush.bf16.msra.mxu0 %v368
      %441 = vmatpush.bf16.msra.mxu0 %v366
      %442 = vmatpush.bf16.msra.mxu0 %v364
      %443 = vmatpush.bf16.msra.mxu0 %v362
      %444 = vmatpush.bf16.msra.mxu0 %v360
      %445 = vmatpush.bf16.msra.mxu0 %v358
      %446 = vmatmul.bf16.gmra.mxu0 %v293
      %v447 = vpop.f32.mrf.mxu0
      %v448 = vadd.f32 0.0, %v447
      %v449 = vpop.f32.mrf.mxu0
      %v450 = vadd.f32 0.0, %v449
      %451 = vmatmul.bf16.gmra.mxu0 %v294
      %v452 = vpop.f32.mrf.mxu0
      %v453 = vadd.f32 0.0, %v452
      %v454 = vpop.f32.mrf.mxu0
      %v455 = vadd.f32 0.0, %v454
      %456 = vmatmul.bf16.gmra.mxu0 %v295
      %v457 = vpop.f32.mrf.mxu0
      %v458 = vadd.f32 0.0, %v457
      %v459 = vpop.f32.mrf.mxu0
      %v460 = vadd.f32 0.0, %v459
      %461 = vmatmul.bf16.gmra.mxu0 %v296
      %v462 = vpop.f32.mrf.mxu0
      %v463 = vadd.f32 0.0, %v462
      %v464 = vpop.f32.mrf.mxu0
      %v465 = vadd.f32 0.0, %v464
      %466 = vmatmul.bf16.gmra.mxu0 %v297
      %v467 = vpop.f32.mrf.mxu0
      %v468 = vadd.f32 0.0, %v467
      %v469 = vpop.f32.mrf.mxu0
      %v470 = vadd.f32 0.0, %v469
      %471 = vmatmul.bf16.gmra.mxu0 %v298
      %v472 = vpop.f32.mrf.mxu0
      %v473 = vadd.f32 0.0, %v472
      %v474 = vpop.f32.mrf.mxu0
      %v475 = vadd.f32 0.0, %v474
      %476 = vmatmul.bf16.gmra.mxu0 %v299
      %v477 = vpop.f32.mrf.mxu0
      %v478 = vadd.f32 0.0, %v477
      %v479 = vpop.f32.mrf.mxu0
      %v480 = vadd.f32 0.0, %v479
      %481 = vmatmul.bf16.gmra.mxu0 %v300
      %v482 = vpop.f32.mrf.mxu0
      %v483 = vadd.f32 0.0, %v482
      %v484 = vpop.f32.mrf.mxu0
      %v485 = vadd.f32 0.0, %v484
      %486 = vdwg.mxu0
      %v487 = vpack.c.bf16 %v448, %v399
      %v488 = vpack.c.bf16 %v450, %v401
      %v489 = vpack.c.bf16 %v453, %v404
      %v490 = vpack.c.bf16 %v455, %v406
      %v491 = vpack.c.bf16 %v458, %v409
      %v492 = vpack.c.bf16 %v460, %v411
      %v493 = vpack.c.bf16 %v463, %v414
      %v494 = vpack.c.bf16 %v465, %v416
      %v495 = vpack.c.bf16 %v468, %v419
      %v496 = vpack.c.bf16 %v470, %v421
      %v497 = vpack.c.bf16 %v473, %v424
      %v498 = vpack.c.bf16 %v475, %v426
      %v499 = vpack.c.bf16 %v478, %v429
      %v500 = vpack.c.bf16 %v480, %v431
      %v501 = vpack.c.bf16 %v483, %v434
      %v502 = vpack.c.bf16 %v485, %v436
      %503 = vst [vmem:[%s220] sm:$0xff] %v487
      %504 = vst [vmem:[%s220 + $0x8] sm:$0xff] %v488
      %505 = vst [vmem:[%s220 + $0x10] sm:$0xff] %v489
      %506 = vst [vmem:[%s220 + $0x18] sm:$0xff] %v490
      %507 = vst [vmem:[%s220 + $0x20] sm:$0xff] %v491
      %508 = vst [vmem:[%s220 + $0x28] sm:$0xff] %v492
      %509 = vst [vmem:[%s220 + $0x30] sm:$0xff] %v493
      %510 = vst [vmem:[%s220 + $0x38] sm:$0xff] %v494
      %511 = vst [vmem:[%s220 + $0x40] sm:$0xff] %v495
      %512 = vst [vmem:[%s220 + $0x48] sm:$0xff] %v496
      %513 = vst [vmem:[%s220 + $0x50] sm:$0xff] %v497
      %514 = vst [vmem:[%s220 + $0x58] sm:$0xff] %v498
      %515 = vst [vmem:[%s220 + $0x60] sm:$0xff] %v499
      %516 = vst [vmem:[%s220 + $0x68] sm:$0xff] %v500
      %517 = vst [vmem:[%s220 + $0x70] sm:$0xff] %v501
      %518 = vst [vmem:[%s220 + $0x78] sm:$0xff] %v502
      %p519 = scmp.lt.s32.totalorder %s20, 0
      // Predicated region
      $region29: #{conv_norm_relu_1d.2} parent=27 // pred_check
        %p520 = pneg %p519
      $region30: #{conv_norm_relu_1d.2} parent=27 // pred_check_branch
        %522 = sbr.rel (%p520) target = $region32
      $region31: #{conv_norm_relu_1d.2} parent=27 // pred_region
        %v523 = vadd.f32 %v399, %v401
        %v524 = vadd.f32 %v523, %v404
        %v525 = vadd.f32 %v524, %v406
        %v526 = vadd.f32 %v525, %v409
        %v527 = vadd.f32 %v526, %v411
        %v528 = vadd.f32 %v527, %v414
        %v529 = vadd.f32 %v528, %v416
        %v530 = vadd.f32 %v529, %v419
        %v531 = vadd.f32 %v530, %v421
        %v532 = vadd.f32 %v531, %v424
        %v533 = vadd.f32 %v532, %v426
        %v534 = vadd.f32 %v533, %v429
        %v535 = vadd.f32 %v534, %v431
        %v536 = vadd.f32 %v535, %v434
        %v537 = vadd.f32 %v536, %v436
        %v538 = vrot.slane %v537, 4
        %v539 = vadd.f32 %v537, %v538
        %v540 = vrot.slane %v539, 2
        %v541 = vadd.f32 %v539, %v540
        %v542 = vrot.slane %v541, 1
        %v543 = vadd.f32 %v541, %v542
        %v544 = vmul.f32 %v543, 0.0078125
        %v545 = vsub.f32 %v399, %v544
        %v546 = vsub.f32 %v401, %v544
        %v547 = vsub.f32 %v404, %v544
        %v548 = vsub.f32 %v406, %v544
        %v549 = vsub.f32 %v409, %v544
        %v550 = vsub.f32 %v411, %v544
        %v551 = vsub.f32 %v414, %v544
        %v552 = vsub.f32 %v416, %v544
        %v553 = vsub.f32 %v419, %v544
        %v554 = vsub.f32 %v421, %v544
        %v555 = vsub.f32 %v424, %v544
        %v556 = vsub.f32 %v426, %v544
        %v557 = vsub.f32 %v429, %v544
        %v558 = vsub.f32 %v431, %v544
        %v559 = vsub.f32 %v434, %v544
        %v560 = vsub.f32 %v436, %v544
        %v561 = vmul.f32 %v545, %v545
        %v562 = vmul.f32 %v546, %v546
        %v563 = vmul.f32 %v547, %v547
        %v564 = vmul.f32 %v548, %v548
        %v565 = vmul.f32 %v549, %v549
        %v566 = vmul.f32 %v550, %v550
        %v567 = vmul.f32 %v551, %v551
        %v568 = vmul.f32 %v552, %v552
        %v569 = vmul.f32 %v553, %v553
        %v570 = vmul.f32 %v554, %v554
        %v571 = vmul.f32 %v555, %v555
        %v572 = vmul.f32 %v556, %v556
        %v573 = vmul.f32 %v557, %v557
        %v574 = vmul.f32 %v558, %v558
        %v575 = vmul.f32 %v559, %v559
        %v576 = vmul.f32 %v560, %v560
        %v577 = vadd.f32 %v561, %v562
        %v578 = vadd.f32 %v577, %v563
        %v579 = vadd.f32 %v578, %v564
        %v580 = vadd.f32 %v579, %v565
        %v581 = vadd.f32 %v580, %v566
        %v582 = vadd.f32 %v581, %v567
        %v583 = vadd.f32 %v582, %v568
        %v584 = vadd.f32 %v583, %v569
        %v585 = vadd.f32 %v584, %v570
        %v586 = vadd.f32 %v585, %v571
        %v587 = vadd.f32 %v586, %v572
        %v588 = vadd.f32 %v587, %v573
        %v589 = vadd.f32 %v588, %v574
        %v590 = vadd.f32 %v589, %v575
        %v591 = vadd.f32 %v590, %v576
        %v592 = vrot.slane %v591, 4
        %v593 = vadd.f32 %v591, %v592
        %v594 = vrot.slane %v593, 2
        %v595 = vadd.f32 %v593, %v594
        %v596 = vrot.slane %v595, 1
        %v597 = vadd.f32 %v595, %v596
        %vm598 = vcmask 1040384
        %v599 = vsel %vm598, %v543, %v597
        %600 = vst [vmem:[%s228] sm:$0x3] %v599
      $region32: #{conv_norm_relu_1d.2} parent=27 // pred_fallthru
        _
      %p601 = scmp.ge.s32.totalorder %s20, 0
      // Predicated region
      $region33: #{conv_norm_relu_1d.2} parent=27 // pred_check
        %p602 = pneg %p601
      $region34: #{conv_norm_relu_1d.2} parent=27 // pred_check_branch
        %604 = sbr.rel (%p602) target = $region36
      $region35: #{conv_norm_relu_1d.2} parent=27 // pred_region
        %v605 = vlaneseq
        %v606 = vshrl.u32 %v605, 7
        %v607 = vadd.s32 %v606, 8
        %v608 = vadd.s32 %v606, 16
        %v609 = vadd.s32 %v606, 24
        %v610 = vadd.s32 %v606, 32
        %v611 = vadd.s32 %v606, 40
        %v612 = vadd.s32 %v606, 48
        %v613 = vadd.s32 %v606, 56
        %v614 = vadd.s32 %v606, 64
        %v615 = vadd.s32 %v606, 72
        %v616 = vadd.s32 %v606, 80
        %v617 = vadd.s32 %v606, 88
        %v618 = vadd.s32 %v606, 96
        %v619 = vadd.s32 %v606, 104
        %v620 = vadd.s32 %v606, 112
        %v621 = vadd.s32 %v606, 120
        %vm622 = vcmp.lt.s32.totalorder %v606, 16
        %vm623 = vcmp.lt.s32.totalorder %v607, 16
        %vm624 = vcmp.lt.s32.totalorder %v608, 16
        %vm625 = vcmp.lt.s32.totalorder %v609, 16
        %vm626 = vcmp.lt.s32.totalorder %v610, 16
        %vm627 = vcmp.lt.s32.totalorder %v611, 16
        %vm628 = vcmp.lt.s32.totalorder %v612, 16
        %vm629 = vcmp.lt.s32.totalorder %v613, 16
        %vm630 = vcmp.lt.s32.totalorder %v614, 16
        %vm631 = vcmp.lt.s32.totalorder %v615, 16
        %vm632 = vcmp.lt.s32.totalorder %v616, 16
        %vm633 = vcmp.lt.s32.totalorder %v617, 16
        %vm634 = vcmp.lt.s32.totalorder %v618, 16
        %vm635 = vcmp.lt.s32.totalorder %v619, 16
        %vm636 = vcmp.lt.s32.totalorder %v620, 16
        %vm637 = vcmp.lt.s32.totalorder %v621, 16
        %v638 = vsel %vm622, 1, 0
        %v639 = vsel %vm623, 1, 0
        %v640 = vsel %vm624, 1, 0
        %v641 = vsel %vm625, 1, 0
        %v642 = vsel %vm626, 1, 0
        %v643 = vsel %vm627, 1, 0
        %v644 = vsel %vm628, 1, 0
        %v645 = vsel %vm629, 1, 0
        %v646 = vsel %vm630, 1, 0
        %v647 = vsel %vm631, 1, 0
        %v648 = vsel %vm632, 1, 0
        %v649 = vsel %vm633, 1, 0
        %v650 = vsel %vm634, 1, 0
        %v651 = vsel %vm635, 1, 0
        %v652 = vsel %vm636, 1, 0
        %v653 = vsel %vm637, 1, 0
        %v654 = vcvt.s32.f32 %v638
        %v655 = vcvt.s32.f32 %v639
        %v656 = vcvt.s32.f32 %v640
        %v657 = vcvt.s32.f32 %v641
        %v658 = vcvt.s32.f32 %v642
        %v659 = vcvt.s32.f32 %v643
        %v660 = vcvt.s32.f32 %v644
        %v661 = vcvt.s32.f32 %v645
        %v662 = vcvt.s32.f32 %v646
        %v663 = vcvt.s32.f32 %v647
        %v664 = vcvt.s32.f32 %v648
        %v665 = vcvt.s32.f32 %v649
        %v666 = vcvt.s32.f32 %v650
        %v667 = vcvt.s32.f32 %v651
        %v668 = vcvt.s32.f32 %v652
        %v669 = vcvt.s32.f32 %v653
        %v670 = vmul.f32 %v399, %v654
        %v671 = vmul.f32 %v401, %v655
        %v672 = vmul.f32 %v404, %v656
        %v673 = vmul.f32 %v406, %v657
        %v674 = vmul.f32 %v409, %v658
        %v675 = vmul.f32 %v411, %v659
        %v676 = vmul.f32 %v414, %v660
        %v677 = vmul.f32 %v416, %v661
        %v678 = vmul.f32 %v419, %v662
        %v679 = vmul.f32 %v421, %v663
        %v680 = vmul.f32 %v424, %v664
        %v681 = vmul.f32 %v426, %v665
        %v682 = vmul.f32 %v429, %v666
        %v683 = vmul.f32 %v431, %v667
        %v684 = vmul.f32 %v434, %v668
        %v685 = vmul.f32 %v436, %v669
        %v686 = vadd.f32 %v670, %v671
        %v687 = vadd.f32 %v686, %v672
        %v688 = vadd.f32 %v687, %v673
        %v689 = vadd.f32 %v688, %v674
        %v690 = vadd.f32 %v689, %v675
        %v691 = vadd.f32 %v690, %v676
        %v692 = vadd.f32 %v691, %v677
        %v693 = vadd.f32 %v692, %v678
        %v694 = vadd.f32 %v693, %v679
        %v695 = vadd.f32 %v694, %v680
        %v696 = vadd.f32 %v695, %v681
        %v697 = vadd.f32 %v696, %v682
        %v698 = vadd.f32 %v697, %v683
        %v699 = vadd.f32 %v698, %v684
        %v700 = vadd.f32 %v699, %v685
        %v701 = vrot.slane %v700, 4
        %v702 = vadd.f32 %v700, %v701
        %v703 = vrot.slane %v702, 2
        %v704 = vadd.f32 %v702, %v703
        %v705 = vrot.slane %v704, 1
        %v706 = vadd.f32 %v704, %v705
        %v707 = vmul.f32 %v706, 0.0625
        %v708 = vsub.f32 %v399, %v707
        %v709 = vsub.f32 %v401, %v707
        %v710 = vsub.f32 %v404, %v707
        %v711 = vsub.f32 %v406, %v707
        %v712 = vsub.f32 %v409, %v707
        %v713 = vsub.f32 %v411, %v707
        %v714 = vsub.f32 %v414, %v707
        %v715 = vsub.f32 %v416, %v707
        %v716 = vsub.f32 %v419, %v707
        %v717 = vsub.f32 %v421, %v707
        %v718 = vsub.f32 %v424, %v707
        %v719 = vsub.f32 %v426, %v707
        %v720 = vsub.f32 %v429, %v707
        %v721 = vsub.f32 %v431, %v707
        %v722 = vsub.f32 %v434, %v707
        %v723 = vsub.f32 %v436, %v707
        %v724 = vmul.f32 %v708, %v654
        %v725 = vmul.f32 %v709, %v655
        %v726 = vmul.f32 %v710, %v656
        %v727 = vmul.f32 %v711, %v657
        %v728 = vmul.f32 %v712, %v658
        %v729 = vmul.f32 %v713, %v659
        %v730 = vmul.f32 %v714, %v660
        %v731 = vmul.f32 %v715, %v661
        %v732 = vmul.f32 %v716, %v662
        %v733 = vmul.f32 %v717, %v663
        %v734 = vmul.f32 %v718, %v664
        %v735 = vmul.f32 %v719, %v665
        %v736 = vmul.f32 %v720, %v666
        %v737 = vmul.f32 %v721, %v667
        %v738 = vmul.f32 %v722, %v668
        %v739 = vmul.f32 %v723, %v669
        %v740 = vmul.f32 %v724, %v724
        %v741 = vmul.f32 %v725, %v725
        %v742 = vmul.f32 %v726, %v726
        %v743 = vmul.f32 %v727, %v727
        %v744 = vmul.f32 %v728, %v728
        %v745 = vmul.f32 %v729, %v729
        %v746 = vmul.f32 %v730, %v730
        %v747 = vmul.f32 %v731, %v731
        %v748 = vmul.f32 %v732, %v732
        %v749 = vmul.f32 %v733, %v733
        %v750 = vmul.f32 %v734, %v734
        %v751 = vmul.f32 %v735, %v735
        %v752 = vmul.f32 %v736, %v736
        %v753 = vmul.f32 %v737, %v737
        %v754 = vmul.f32 %v738, %v738
        %v755 = vmul.f32 %v739, %v739
        %v756 = vadd.f32 %v740, %v741
        %v757 = vadd.f32 %v756, %v742
        %v758 = vadd.f32 %v757, %v743
        %v759 = vadd.f32 %v758, %v744
        %v760 = vadd.f32 %v759, %v745
        %v761 = vadd.f32 %v760, %v746
        %v762 = vadd.f32 %v761, %v747
        %v763 = vadd.f32 %v762, %v748
        %v764 = vadd.f32 %v763, %v749
        %v765 = vadd.f32 %v764, %v750
        %v766 = vadd.f32 %v765, %v751
        %v767 = vadd.f32 %v766, %v752
        %v768 = vadd.f32 %v767, %v753
        %v769 = vadd.f32 %v768, %v754
        %v770 = vadd.f32 %v769, %v755
        %v771 = vrot.slane %v770, 4
        %v772 = vadd.f32 %v770, %v771
        %v773 = vrot.slane %v772, 2
        %v774 = vadd.f32 %v772, %v773
        %v775 = vrot.slane %v774, 1
        %v776 = vadd.f32 %v774, %v775
        %vm777 = vcmask 1040384
        %v778 = vsel %vm777, %v706, %v776
        %779 = vst [vmem:[%s228] sm:$0x3] %v778
      $region36: #{conv_norm_relu_1d.2} parent=27 // pred_fallthru
        _
      %s780 = smul.u32 16, %s20
      %p781 = scmp.lt.s32.totalorder %s19, 1
      %s782 = scalar_select %p781, %s19, 1
      %p783 = scmp.lt.s32.totalorder %s780, 15
      %s784 = scalar_select %p783, %s780, 15
      %s785 = smul.addr %s784, 2
      %s786 = smul.addr %s782, 32
      %s787 = sadd.s32 %s785, %s786
      %s788 = smul.addr %s787, 4
      %s789 = scalar_lea.vmem %s2, %s788
      %p790 = scmp.lt.s32.totalorder %s19, 1
      %s791 = scalar_select %p790, %s19, 1
      %p792 = scmp.lt.s32.totalorder %s20, 0
      %s793 = scalar_select %p792, %s20, 0
      %s794 = sadd.s32 %s793, %s791
      %s795 = smul.addr %s794, 2
      %s796 = scalar_lea.vmem %s3, %s795
      // Predicated region
      $region37: #{conv_norm_relu_1d.2} parent=27 // pred_check
        %p797 = pneg %p96
      $region38: #{conv_norm_relu_1d.2} parent=27 // pred_check_branch
        %799 = sbr.rel (%p797) target = $region40
      $region39: #{conv_norm_relu_1d.2} parent=27 // pred_region
        %s800 = smul.u32 16, %s20
      $region40: #{conv_norm_relu_1d.2} parent=27 // pred_fallthru
        _
      // Predicated region
      $region41: #{conv_norm_relu_1d.2} parent=27 // pred_check
        %p801 = pneg %p124
      $region42: #{conv_norm_relu_1d.2} parent=27 // pred_check_branch
        %803 = sbr.rel (%p801) target = $region44
      $region43: #{conv_norm_relu_1d.2} parent=27 // pred_region
        _
      $region44: #{conv_norm_relu_1d.2} parent=27 // pred_fallthru
        _
    $region28: #{conv_norm_relu_1d.2} parent=5 // pred_fallthru
      _
    %p804 = scmp.le.s32.totalorder 2, %s10
    // Predicated region
    $region45: #{conv_norm_relu_1d.2} parent=5 // pred_check
      %p805 = pneg %p804
    $region46: #{conv_norm_relu_1d.2} parent=5 // pred_check_branch
      %807 = sbr.rel (%p805) target = $region48
    $region47: #{conv_norm_relu_1d.2} parent=5 // pred_region
      %s808 = ssub.s32 %s10, 2
      // Predicated region
      $region49: #{conv_norm_relu_1d.2} parent=47 // pred_check
        %p809 = pneg %p102
      $region50: #{conv_norm_relu_1d.2} parent=47 // pred_check_branch
        %811 = sbr.rel (%p809) target = $region52
      $region51: #{conv_norm_relu_1d.2} parent=47 // pred_region
        %s812 = smul.u32 16, %s22
        %p813 = scmp.lt.s32.totalorder %s21, 1
        %s814 = scalar_select %p813, %s21, 1
        %p815 = scmp.lt.s32.totalorder %s812, 15
        %s816 = scalar_select %p815, %s812, 15
        %s817 = smul.addr %s816, 2
        %s818 = smul.addr %s814, 32
        %s819 = sadd.s32 %s817, %s818
        %s820 = smul.addr %s819, 4
        %s821 = scalar_lea.vmem %s2, %s820
      $region52: #{conv_norm_relu_1d.2} parent=47 // pred_fallthru
        _
      // Predicated region
      $region53: #{conv_norm_relu_1d.2} parent=47 // pred_check
        %p822 = pneg %p130
      $region54: #{conv_norm_relu_1d.2} parent=47 // pred_check_branch
        %824 = sbr.rel (%p822) target = $region56
      $region55: #{conv_norm_relu_1d.2} parent=47 // pred_region
        %p825 = scmp.lt.s32.totalorder %s21, 1
        %s826 = scalar_select %p825, %s21, 1
        %p827 = scmp.lt.s32.totalorder %s22, 0
        %s828 = scalar_select %p827, %s22, 0
        %s829 = sadd.s32 %s828, %s826
        %s830 = smul.addr %s829, 2
        %s831 = scalar_lea.vmem %s3, %s830
      $region56: #{conv_norm_relu_1d.2} parent=47 // pred_fallthru
        _
    $region48: #{conv_norm_relu_1d.2} parent=5 // pred_fallthru
      _
  $region6: #{conv_norm_relu_1d.2} parent=0 // loop_footer
    %s14 = sadd.s32 1, %s10
  $region7: #{conv_norm_relu_1d.2} parent=0 // loop_footer_branch
    %9 = sbr.rel target = $region3
  $region8: #{conv_norm_relu_1d.2} parent=0 // loop_exit
    _

</llo_original>
